<compile_context>
chip_gen: v5e
topology: v5e:2x2
jax: 0.10.0
libtpu: 0.0.40
codegen_flags: <defaults>
</compile_context>

<pallas_src>
import functools

import jax
import jax.numpy as jnp
import numpy as np
from jax import lax
from jax.experimental import pallas as pl
from jax.experimental.pallas import tpu as pltpu

# ---- hyperparameters fixed by the PyTorch module ----
C_IN = 16        # Filters   (in_channels)
C_OUT = 16       # Channels  (out_channels)
KSIZE = 51       # Kernel_size
DIL = 8          # Dilation
DTYPE = jnp.float32   # enable_BF16 = False

# ---- packing / tiling constants ----
TAPS_PER_GROUP = 16                       # 16 taps * 16 ch -> K = 256 contraction
N_GROUPS = -(-KSIZE // TAPS_PER_GROUP)    # 4
K_PAD = N_GROUPS * TAPS_PER_GROUP         # 64 (taps 51..63 carry zero weights)
MAX_W_TILE = 512                          # lane-tile cap (multiple of 128)


def _round_up(x, m):
    return (x + m - 1) // m * m


def _conv1d_kernel(x_ref, w_ref, o_ref, *, w_tile, n_w_tiles):
    """One grid step = one (batch element, output W-tile).

    x_ref: (1, C_IN, W_IN_PAD)    full padded input row (resident across W tiles)
    w_ref: (N_GROUPS, C_OUT, TAPS_PER_GROUP*C_IN)   lane-dense packed weights
    o_ref: (1, C_OUT, w_tile)
    """
    if n_w_tiles == 1:
        base = 0                                        # fully static slice starts
    else:
        base = pl.multiple_of(pl.program_id(1) * w_tile, 128)

    acc = jnp.zeros((C_OUT, w_tile), jnp.float32)
    for g in range(N_GROUPS):                           # statically unrolled
        # Gather this group's 16 dilated windows into a (256, w_tile) slab.
        taps = [
            x_ref[0, :, pl.ds(base + (g * TAPS_PER_GROUP + j) * DIL, w_tile)]
            for j in range(TAPS_PER_GROUP)
        ]
        slab = jnp.concatenate(taps, axis=0)            # (TAPS_PER_GROUP*C_IN, w_tile)
        # MXU matmul with full K=256 contraction depth.
        acc = acc + jnp.dot(w_ref[g], slab, preferred_element_type=jnp.float32)

    o_ref[0, :, :] = acc.astype(o_ref.dtype)


def conv1d_dilated_pallas(x, w_groups):
    """x: (N, C_IN, W_IN); w_groups: (N_GROUPS, C_OUT, TAPS_PER_GROUP*C_IN)."""
    n, c_in, w_in = x.shape
    assert c_in == C_IN
    w_out = w_in - DIL * (KSIZE - 1)
    assert w_out > 0, "input width too small for kernel_size=51, dilation=8"

    # Lane-dense output tiling (unmasked stores, >=N*n_w_tiles grid steps).
    w_tile = min(MAX_W_TILE, _round_up(w_out, 128))
    w_out_pad = _round_up(w_out, w_tile)
    n_w_tiles = w_out_pad // w_tile

    # Pad input so every (tap, tile) slice is in bounds.  Padded taps have zero
    # weights and padded output columns are sliced off below.
    w_in_pad = _round_up(w_out_pad + (K_PAD - 1) * DIL, 128)
    x_pad = jnp.pad(x, ((0, 0), (0, 0), (0, w_in_pad - w_in)))

    itemsize = x_pad.dtype.itemsize
    cost = pl.CostEstimate(
        flops=2 * n * C_OUT * w_out * C_IN * KSIZE,
        transcendentals=0,
        bytes_accessed=(x_pad.size * itemsize
                        + w_groups.size * w_groups.dtype.itemsize
                        + n * C_OUT * w_out_pad * itemsize),
    )

    kernel = functools.partial(_conv1d_kernel, w_tile=w_tile, n_w_tiles=n_w_tiles)

    out_pad = pl.pallas_call(
        kernel,
        out_shape=jax.ShapeDtypeStruct((n, C_OUT, w_out_pad), x_pad.dtype),
        grid_spec=pltpu.PrefetchScalarGridSpec(
            num_scalar_prefetch=0,
            grid=(n, n_w_tiles),
            in_specs=[
                # Full padded input row per batch element; block index constant
                # along the W-tile axis -> fetched once, reused across W tiles.
                pl.BlockSpec((1, C_IN, w_in_pad), lambda b, wt: (b, 0, 0)),
                # Lane-dense weight slab, resident across the whole grid.
                pl.BlockSpec((N_GROUPS, C_OUT, TAPS_PER_GROUP * C_IN),
                             lambda b, wt: (0, 0, 0)),
            ],
            out_specs=pl.BlockSpec((1, C_OUT, w_tile), lambda b, wt: (b, 0, wt)),
        ),
        compiler_params=pltpu.CompilerParams(
            dimension_semantics=("parallel", "parallel")),
        cost_estimate=cost,
    )(x_pad, w_groups)

    return out_pad[:, :, :w_out]


def pack_weights(weight_oik, dtype):
    """torch Conv1d weight (C_OUT, C_IN, KSIZE) -> lane-dense (N_GROUPS, C_OUT, G*C_IN)."""
    w = jnp.pad(weight_oik, ((0, 0), (0, 0), (0, K_PAD - KSIZE)))     # zero taps 51..63
    w = jnp.transpose(w, (2, 0, 1))                                   # (K_PAD, C_OUT, C_IN)
    w = w.reshape(N_GROUPS, TAPS_PER_GROUP, C_OUT, C_IN)
    w = jnp.transpose(w, (0, 2, 1, 3))                                # (NG, C_OUT, G, C_IN)
    w = w.reshape(N_GROUPS, C_OUT, TAPS_PER_GROUP * C_IN)
    return w.astype(dtype)


def net2_forward(x, weight_oik, *, use_bf16=False):
    """weight_oik: torch Conv1d layout (C_OUT, C_IN, KSIZE)."""
    dtype = jnp.bfloat16 if use_bf16 else jnp.float32
    w_groups = pack_weights(weight_oik, dtype)
    return conv1d_dilated_pallas(x.astype(dtype), w_groups)


if __name__ == "__main__":
    key = jax.random.PRNGKey(0)
    kx, kw = jax.random.split(key)

    # Deterministic Conv1d-style init (kaiming-uniform bound = 1/sqrt(fan_in)).
    bound = 1.0 / np.sqrt(C_IN * KSIZE)
    weight = jax.random.uniform(
        kw, (C_OUT, C_IN, KSIZE), dtype=jnp.float32, minval=-bound, maxval=bound)

    def reference(xx):
        return lax.conv_general_dilated(
            xx, weight, window_strides=(1,), padding="VALID",
            rhs_dilation=(DIL,), dimension_numbers=("NCH", "OIH", "NCH"))

    # Case 1: minimal width -> single 128-wide lane tile (W_out = 128), grid (2, 1).
    N1, W1 = 2, 528
    x1 = jax.random.normal(kx, (N1, C_IN, W1), dtype=DTYPE)
    out1 = jax.block_until_ready(net2_forward(x1, weight))
    np.testing.assert_allclose(np.asarray(out1), np.asarray(reference(x1)),
                               rtol=2e-3, atol=2e-3)
    assert out1.shape == (N1, C_OUT, W1 - DIL * (KSIZE - 1))

    # Case 2: wider input -> W_out = 640 padded to 2 x 512 lane tiles, grid (2, 2).
    N2, W2 = 2, 1040
    x2 = jax.random.normal(kx, (N2, C_IN, W2), dtype=DTYPE)
    out2 = jax.block_until_ready(net2_forward(x2, weight))
    np.testing.assert_allclose(np.asarray(out2), np.asarray(reference(x2)),
                               rtol=2e-3, atol=2e-3)
    assert out2.shape == (N2, C_OUT, W2 - DIL * (KSIZE - 1))

    # Optional bf16 path (enable_BF16 analogue): smoke-test it runs.
    out_bf16 = jax.block_until_ready(net2_forward(x1, weight, use_bf16=True))
    assert out_bf16.shape == out1.shape and out_bf16.dtype == jnp.bfloat16

    print("KERNEL_OK")
</pallas_src>

<mosaic_0001>
module attributes {stable_mosaic.version = 11 : i64} {
  func.func @_conv1d_kernel(%arg0: i32, %arg1: i32, %arg2: memref<1x16x640xf32, #tpu.memory_space<vmem>>, %arg3: memref<4x16x256xf32, #tpu.memory_space<vmem>>, %arg4: memref<1x16x128xf32, #tpu.memory_space<vmem>>) attributes {dimension_semantics = [#tpu.dimension_semantics<parallel>, #tpu.dimension_semantics<parallel>], iteration_bounds = array<i64: 2, 1>, scalar_prefetch = 0 : i64, scratch_operands = 0 : i64, tpu.core_type = #tpu.core_type<tc>, window_params = [{transform_indices = @transform_0, window_bounds = array<i64: 1, 16, 640>}, {pipeline_mode = #tpu.pipeline_mode<synchronous>, transform_indices = @transform_1, window_bounds = array<i64: 4, 16, 256>}, {transform_indices = @transform_2, window_bounds = array<i64: 1, 16, 128>}]} {
    %cst = arith.constant 0.000000e+00 : f32
    %0 = vector.broadcast %cst : f32 to vector<16x128xf32>
    %c0 = arith.constant 0 : index
    %c0_0 = arith.constant 0 : index
    %c0_1 = arith.constant 0 : index
    %1 = vector.load %arg2[%c0, %c0_0, %c0_1] : memref<1x16x640xf32, #tpu.memory_space<vmem>>, vector<1x16x128xf32>
    %2 = vector.shape_cast %1 : vector<1x16x128xf32> to vector<16x128xf32>
    %c0_2 = arith.constant 0 : index
    %c0_3 = arith.constant 0 : index
    %c8 = arith.constant 8 : index
    %3 = vector.load %arg2[%c0_2, %c0_3, %c8] : memref<1x16x640xf32, #tpu.memory_space<vmem>>, vector<1x16x128xf32>
    %4 = vector.shape_cast %3 : vector<1x16x128xf32> to vector<16x128xf32>
    %c0_4 = arith.constant 0 : index
    %c0_5 = arith.constant 0 : index
    %c16 = arith.constant 16 : index
    %5 = vector.load %arg2[%c0_4, %c0_5, %c16] : memref<1x16x640xf32, #tpu.memory_space<vmem>>, vector<1x16x128xf32>
    %6 = vector.shape_cast %5 : vector<1x16x128xf32> to vector<16x128xf32>
    %c0_6 = arith.constant 0 : index
    %c0_7 = arith.constant 0 : index
    %c24 = arith.constant 24 : index
    %7 = vector.load %arg2[%c0_6, %c0_7, %c24] : memref<1x16x640xf32, #tpu.memory_space<vmem>>, vector<1x16x128xf32>
    %8 = vector.shape_cast %7 : vector<1x16x128xf32> to vector<16x128xf32>
    %c0_8 = arith.constant 0 : index
    %c0_9 = arith.constant 0 : index
    %c32 = arith.constant 32 : index
    %9 = vector.load %arg2[%c0_8, %c0_9, %c32] : memref<1x16x640xf32, #tpu.memory_space<vmem>>, vector<1x16x128xf32>
    %10 = vector.shape_cast %9 : vector<1x16x128xf32> to vector<16x128xf32>
    %c0_10 = arith.constant 0 : index
    %c0_11 = arith.constant 0 : index
    %c40 = arith.constant 40 : index
    %11 = vector.load %arg2[%c0_10, %c0_11, %c40] : memref<1x16x640xf32, #tpu.memory_space<vmem>>, vector<1x16x128xf32>
    %12 = vector.shape_cast %11 : vector<1x16x128xf32> to vector<16x128xf32>
    %c0_12 = arith.constant 0 : index
    %c0_13 = arith.constant 0 : index
    %c48 = arith.constant 48 : index
    %13 = vector.load %arg2[%c0_12, %c0_13, %c48] : memref<1x16x640xf32, #tpu.memory_space<vmem>>, vector<1x16x128xf32>
    %14 = vector.shape_cast %13 : vector<1x16x128xf32> to vector<16x128xf32>
    %c0_14 = arith.constant 0 : index
    %c0_15 = arith.constant 0 : index
    %c56 = arith.constant 56 : index
    %15 = vector.load %arg2[%c0_14, %c0_15, %c56] : memref<1x16x640xf32, #tpu.memory_space<vmem>>, vector<1x16x128xf32>
    %16 = vector.shape_cast %15 : vector<1x16x128xf32> to vector<16x128xf32>
    %c0_16 = arith.constant 0 : index
    %c0_17 = arith.constant 0 : index
    %c64 = arith.constant 64 : index
    %17 = vector.load %arg2[%c0_16, %c0_17, %c64] : memref<1x16x640xf32, #tpu.memory_space<vmem>>, vector<1x16x128xf32>
    %18 = vector.shape_cast %17 : vector<1x16x128xf32> to vector<16x128xf32>
    %c0_18 = arith.constant 0 : index
    %c0_19 = arith.constant 0 : index
    %c72 = arith.constant 72 : index
    %19 = vector.load %arg2[%c0_18, %c0_19, %c72] : memref<1x16x640xf32, #tpu.memory_space<vmem>>, vector<1x16x128xf32>
    %20 = vector.shape_cast %19 : vector<1x16x128xf32> to vector<16x128xf32>
    %c0_20 = arith.constant 0 : index
    %c0_21 = arith.constant 0 : index
    %c80 = arith.constant 80 : index
    %21 = vector.load %arg2[%c0_20, %c0_21, %c80] : memref<1x16x640xf32, #tpu.memory_space<vmem>>, vector<1x16x128xf32>
    %22 = vector.shape_cast %21 : vector<1x16x128xf32> to vector<16x128xf32>
    %c0_22 = arith.constant 0 : index
    %c0_23 = arith.constant 0 : index
    %c88 = arith.constant 88 : index
    %23 = vector.load %arg2[%c0_22, %c0_23, %c88] : memref<1x16x640xf32, #tpu.memory_space<vmem>>, vector<1x16x128xf32>
    %24 = vector.shape_cast %23 : vector<1x16x128xf32> to vector<16x128xf32>
    %c0_24 = arith.constant 0 : index
    %c0_25 = arith.constant 0 : index
    %c96 = arith.constant 96 : index
    %25 = vector.load %arg2[%c0_24, %c0_25, %c96] : memref<1x16x640xf32, #tpu.memory_space<vmem>>, vector<1x16x128xf32>
    %26 = vector.shape_cast %25 : vector<1x16x128xf32> to vector<16x128xf32>
    %c0_26 = arith.constant 0 : index
    %c0_27 = arith.constant 0 : index
    %c104 = arith.constant 104 : index
    %27 = vector.load %arg2[%c0_26, %c0_27, %c104] : memref<1x16x640xf32, #tpu.memory_space<vmem>>, vector<1x16x128xf32>
    %28 = vector.shape_cast %27 : vector<1x16x128xf32> to vector<16x128xf32>
    %c0_28 = arith.constant 0 : index
    %c0_29 = arith.constant 0 : index
    %c112 = arith.constant 112 : index
    %29 = vector.load %arg2[%c0_28, %c0_29, %c112] : memref<1x16x640xf32, #tpu.memory_space<vmem>>, vector<1x16x128xf32>
    %30 = vector.shape_cast %29 : vector<1x16x128xf32> to vector<16x128xf32>
    %c0_30 = arith.constant 0 : index
    %c0_31 = arith.constant 0 : index
    %c120 = arith.constant 120 : index
    %31 = vector.load %arg2[%c0_30, %c0_31, %c120] : memref<1x16x640xf32, #tpu.memory_space<vmem>>, vector<1x16x128xf32>
    %32 = vector.shape_cast %31 : vector<1x16x128xf32> to vector<16x128xf32>
    %33 = tpu.concatenate %2, %4, %6, %8, %10, %12, %14, %16, %18, %20, %22, %24, %26, %28, %30, %32 in 0 : vector<16x128xf32>, vector<16x128xf32>, vector<16x128xf32>, vector<16x128xf32>, vector<16x128xf32>, vector<16x128xf32>, vector<16x128xf32>, vector<16x128xf32>, vector<16x128xf32>, vector<16x128xf32>, vector<16x128xf32>, vector<16x128xf32>, vector<16x128xf32>, vector<16x128xf32>, vector<16x128xf32>, vector<16x128xf32> -> vector<256x128xf32>
    %c0_32 = arith.constant 0 : index
    %c0_33 = arith.constant 0 : index
    %c0_34 = arith.constant 0 : index
    %34 = vector.load %arg3[%c0_32, %c0_33, %c0_34] : memref<4x16x256xf32, #tpu.memory_space<vmem>>, vector<1x16x256xf32>
    %35 = vector.shape_cast %34 : vector<1x16x256xf32> to vector<16x256xf32>
    %cst_35 = arith.constant dense<0.000000e+00> : vector<16x128xf32>
    %36 = tpu.matmul %35, %33, %cst_35 {dimension_numbers = #tpu.dot_dimension_numbers<[1], [0], [0], [1], [0, 0, 1, 1], [], []>} : vector<16x256xf32>, vector<256x128xf32>, vector<16x128xf32> -> vector<16x128xf32>
    %37 = arith.addf %0, %36 : vector<16x128xf32>
    %c0_36 = arith.constant 0 : index
    %c0_37 = arith.constant 0 : index
    %c128 = arith.constant 128 : index
    %38 = vector.load %arg2[%c0_36, %c0_37, %c128] : memref<1x16x640xf32, #tpu.memory_space<vmem>>, vector<1x16x128xf32>
    %39 = vector.shape_cast %38 : vector<1x16x128xf32> to vector<16x128xf32>
    %c0_38 = arith.constant 0 : index
    %c0_39 = arith.constant 0 : index
    %c136 = arith.constant 136 : index
    %40 = vector.load %arg2[%c0_38, %c0_39, %c136] : memref<1x16x640xf32, #tpu.memory_space<vmem>>, vector<1x16x128xf32>
    %41 = vector.shape_cast %40 : vector<1x16x128xf32> to vector<16x128xf32>
    %c0_40 = arith.constant 0 : index
    %c0_41 = arith.constant 0 : index
    %c144 = arith.constant 144 : index
    %42 = vector.load %arg2[%c0_40, %c0_41, %c144] : memref<1x16x640xf32, #tpu.memory_space<vmem>>, vector<1x16x128xf32>
    %43 = vector.shape_cast %42 : vector<1x16x128xf32> to vector<16x128xf32>
    %c0_42 = arith.constant 0 : index
    %c0_43 = arith.constant 0 : index
    %c152 = arith.constant 152 : index
    %44 = vector.load %arg2[%c0_42, %c0_43, %c152] : memref<1x16x640xf32, #tpu.memory_space<vmem>>, vector<1x16x128xf32>
    %45 = vector.shape_cast %44 : vector<1x16x128xf32> to vector<16x128xf32>
    %c0_44 = arith.constant 0 : index
    %c0_45 = arith.constant 0 : index
    %c160 = arith.constant 160 : index
    %46 = vector.load %arg2[%c0_44, %c0_45, %c160] : memref<1x16x640xf32, #tpu.memory_space<vmem>>, vector<1x16x128xf32>
    %47 = vector.shape_cast %46 : vector<1x16x128xf32> to vector<16x128xf32>
    %c0_46 = arith.constant 0 : index
    %c0_47 = arith.constant 0 : index
    %c168 = arith.constant 168 : index
    %48 = vector.load %arg2[%c0_46, %c0_47, %c168] : memref<1x16x640xf32, #tpu.memory_space<vmem>>, vector<1x16x128xf32>
    %49 = vector.shape_cast %48 : vector<1x16x128xf32> to vector<16x128xf32>
    %c0_48 = arith.constant 0 : index
    %c0_49 = arith.constant 0 : index
    %c176 = arith.constant 176 : index
    %50 = vector.load %arg2[%c0_48, %c0_49, %c176] : memref<1x16x640xf32, #tpu.memory_space<vmem>>, vector<1x16x128xf32>
    %51 = vector.shape_cast %50 : vector<1x16x128xf32> to vector<16x128xf32>
    %c0_50 = arith.constant 0 : index
    %c0_51 = arith.constant 0 : index
    %c184 = arith.constant 184 : index
    %52 = vector.load %arg2[%c0_50, %c0_51, %c184] : memref<1x16x640xf32, #tpu.memory_space<vmem>>, vector<1x16x128xf32>
    %53 = vector.shape_cast %52 : vector<1x16x128xf32> to vector<16x128xf32>
    %c0_52 = arith.constant 0 : index
    %c0_53 = arith.constant 0 : index
    %c192 = arith.constant 192 : index
    %54 = vector.load %arg2[%c0_52, %c0_53, %c192] : memref<1x16x640xf32, #tpu.memory_space<vmem>>, vector<1x16x128xf32>
    %55 = vector.shape_cast %54 : vector<1x16x128xf32> to vector<16x128xf32>
    %c0_54 = arith.constant 0 : index
    %c0_55 = arith.constant 0 : index
    %c200 = arith.constant 200 : index
    %56 = vector.load %arg2[%c0_54, %c0_55, %c200] : memref<1x16x640xf32, #tpu.memory_space<vmem>>, vector<1x16x128xf32>
    %57 = vector.shape_cast %56 : vector<1x16x128xf32> to vector<16x128xf32>
    %c0_56 = arith.constant 0 : index
    %c0_57 = arith.constant 0 : index
    %c208 = arith.constant 208 : index
    %58 = vector.load %arg2[%c0_56, %c0_57, %c208] : memref<1x16x640xf32, #tpu.memory_space<vmem>>, vector<1x16x128xf32>
    %59 = vector.shape_cast %58 : vector<1x16x128xf32> to vector<16x128xf32>
    %c0_58 = arith.constant 0 : index
    %c0_59 = arith.constant 0 : index
    %c216 = arith.constant 216 : index
    %60 = vector.load %arg2[%c0_58, %c0_59, %c216] : memref<1x16x640xf32, #tpu.memory_space<vmem>>, vector<1x16x128xf32>
    %61 = vector.shape_cast %60 : vector<1x16x128xf32> to vector<16x128xf32>
    %c0_60 = arith.constant 0 : index
    %c0_61 = arith.constant 0 : index
    %c224 = arith.constant 224 : index
    %62 = vector.load %arg2[%c0_60, %c0_61, %c224] : memref<1x16x640xf32, #tpu.memory_space<vmem>>, vector<1x16x128xf32>
    %63 = vector.shape_cast %62 : vector<1x16x128xf32> to vector<16x128xf32>
    %c0_62 = arith.constant 0 : index
    %c0_63 = arith.constant 0 : index
    %c232 = arith.constant 232 : index
    %64 = vector.load %arg2[%c0_62, %c0_63, %c232] : memref<1x16x640xf32, #tpu.memory_space<vmem>>, vector<1x16x128xf32>
    %65 = vector.shape_cast %64 : vector<1x16x128xf32> to vector<16x128xf32>
    %c0_64 = arith.constant 0 : index
    %c0_65 = arith.constant 0 : index
    %c240 = arith.constant 240 : index
    %66 = vector.load %arg2[%c0_64, %c0_65, %c240] : memref<1x16x640xf32, #tpu.memory_space<vmem>>, vector<1x16x128xf32>
    %67 = vector.shape_cast %66 : vector<1x16x128xf32> to vector<16x128xf32>
    %c0_66 = arith.constant 0 : index
    %c0_67 = arith.constant 0 : index
    %c248 = arith.constant 248 : index
    %68 = vector.load %arg2[%c0_66, %c0_67, %c248] : memref<1x16x640xf32, #tpu.memory_space<vmem>>, vector<1x16x128xf32>
    %69 = vector.shape_cast %68 : vector<1x16x128xf32> to vector<16x128xf32>
    %70 = tpu.concatenate %39, %41, %43, %45, %47, %49, %51, %53, %55, %57, %59, %61, %63, %65, %67, %69 in 0 : vector<16x128xf32>, vector<16x128xf32>, vector<16x128xf32>, vector<16x128xf32>, vector<16x128xf32>, vector<16x128xf32>, vector<16x128xf32>, vector<16x128xf32>, vector<16x128xf32>, vector<16x128xf32>, vector<16x128xf32>, vector<16x128xf32>, vector<16x128xf32>, vector<16x128xf32>, vector<16x128xf32>, vector<16x128xf32> -> vector<256x128xf32>
    %c1 = arith.constant 1 : index
    %c0_68 = arith.constant 0 : index
    %c0_69 = arith.constant 0 : index
    %71 = vector.load %arg3[%c1, %c0_68, %c0_69] : memref<4x16x256xf32, #tpu.memory_space<vmem>>, vector<1x16x256xf32>
    %72 = vector.shape_cast %71 : vector<1x16x256xf32> to vector<16x256xf32>
    %cst_70 = arith.constant dense<0.000000e+00> : vector<16x128xf32>
    %73 = tpu.matmul %72, %70, %cst_70 {dimension_numbers = #tpu.dot_dimension_numbers<[1], [0], [0], [1], [0, 0, 1, 1], [], []>} : vector<16x256xf32>, vector<256x128xf32>, vector<16x128xf32> -> vector<16x128xf32>
    %74 = arith.addf %37, %73 : vector<16x128xf32>
    %c0_71 = arith.constant 0 : index
    %c0_72 = arith.constant 0 : index
    %c256 = arith.constant 256 : index
    %75 = vector.load %arg2[%c0_71, %c0_72, %c256] : memref<1x16x640xf32, #tpu.memory_space<vmem>>, vector<1x16x128xf32>
    %76 = vector.shape_cast %75 : vector<1x16x128xf32> to vector<16x128xf32>
    %c0_73 = arith.constant 0 : index
    %c0_74 = arith.constant 0 : index
    %c264 = arith.constant 264 : index
    %77 = vector.load %arg2[%c0_73, %c0_74, %c264] : memref<1x16x640xf32, #tpu.memory_space<vmem>>, vector<1x16x128xf32>
    %78 = vector.shape_cast %77 : vector<1x16x128xf32> to vector<16x128xf32>
    %c0_75 = arith.constant 0 : index
    %c0_76 = arith.constant 0 : index
    %c272 = arith.constant 272 : index
    %79 = vector.load %arg2[%c0_75, %c0_76, %c272] : memref<1x16x640xf32, #tpu.memory_space<vmem>>, vector<1x16x128xf32>
    %80 = vector.shape_cast %79 : vector<1x16x128xf32> to vector<16x128xf32>
    %c0_77 = arith.constant 0 : index
    %c0_78 = arith.constant 0 : index
    %c280 = arith.constant 280 : index
    %81 = vector.load %arg2[%c0_77, %c0_78, %c280] : memref<1x16x640xf32, #tpu.memory_space<vmem>>, vector<1x16x128xf32>
    %82 = vector.shape_cast %81 : vector<1x16x128xf32> to vector<16x128xf32>
    %c0_79 = arith.constant 0 : index
    %c0_80 = arith.constant 0 : index
    %c288 = arith.constant 288 : index
    %83 = vector.load %arg2[%c0_79, %c0_80, %c288] : memref<1x16x640xf32, #tpu.memory_space<vmem>>, vector<1x16x128xf32>
    %84 = vector.shape_cast %83 : vector<1x16x128xf32> to vector<16x128xf32>
    %c0_81 = arith.constant 0 : index
    %c0_82 = arith.constant 0 : index
    %c296 = arith.constant 296 : index
    %85 = vector.load %arg2[%c0_81, %c0_82, %c296] : memref<1x16x640xf32, #tpu.memory_space<vmem>>, vector<1x16x128xf32>
    %86 = vector.shape_cast %85 : vector<1x16x128xf32> to vector<16x128xf32>
    %c0_83 = arith.constant 0 : index
    %c0_84 = arith.constant 0 : index
    %c304 = arith.constant 304 : index
    %87 = vector.load %arg2[%c0_83, %c0_84, %c304] : memref<1x16x640xf32, #tpu.memory_space<vmem>>, vector<1x16x128xf32>
    %88 = vector.shape_cast %87 : vector<1x16x128xf32> to vector<16x128xf32>
    %c0_85 = arith.constant 0 : index
    %c0_86 = arith.constant 0 : index
    %c312 = arith.constant 312 : index
    %89 = vector.load %arg2[%c0_85, %c0_86, %c312] : memref<1x16x640xf32, #tpu.memory_space<vmem>>, vector<1x16x128xf32>
    %90 = vector.shape_cast %89 : vector<1x16x128xf32> to vector<16x128xf32>
    %c0_87 = arith.constant 0 : index
    %c0_88 = arith.constant 0 : index
    %c320 = arith.constant 320 : index
    %91 = vector.load %arg2[%c0_87, %c0_88, %c320] : memref<1x16x640xf32, #tpu.memory_space<vmem>>, vector<1x16x128xf32>
    %92 = vector.shape_cast %91 : vector<1x16x128xf32> to vector<16x128xf32>
    %c0_89 = arith.constant 0 : index
    %c0_90 = arith.constant 0 : index
    %c328 = arith.constant 328 : index
    %93 = vector.load %arg2[%c0_89, %c0_90, %c328] : memref<1x16x640xf32, #tpu.memory_space<vmem>>, vector<1x16x128xf32>
    %94 = vector.shape_cast %93 : vector<1x16x128xf32> to vector<16x128xf32>
    %c0_91 = arith.constant 0 : index
    %c0_92 = arith.constant 0 : index
    %c336 = arith.constant 336 : index
    %95 = vector.load %arg2[%c0_91, %c0_92, %c336] : memref<1x16x640xf32, #tpu.memory_space<vmem>>, vector<1x16x128xf32>
    %96 = vector.shape_cast %95 : vector<1x16x128xf32> to vector<16x128xf32>
    %c0_93 = arith.constant 0 : index
    %c0_94 = arith.constant 0 : index
    %c344 = arith.constant 344 : index
    %97 = vector.load %arg2[%c0_93, %c0_94, %c344] : memref<1x16x640xf32, #tpu.memory_space<vmem>>, vector<1x16x128xf32>
    %98 = vector.shape_cast %97 : vector<1x16x128xf32> to vector<16x128xf32>
    %c0_95 = arith.constant 0 : index
    %c0_96 = arith.constant 0 : index
    %c352 = arith.constant 352 : index
    %99 = vector.load %arg2[%c0_95, %c0_96, %c352] : memref<1x16x640xf32, #tpu.memory_space<vmem>>, vector<1x16x128xf32>
    %100 = vector.shape_cast %99 : vector<1x16x128xf32> to vector<16x128xf32>
    %c0_97 = arith.constant 0 : index
    %c0_98 = arith.constant 0 : index
    %c360 = arith.constant 360 : index
    %101 = vector.load %arg2[%c0_97, %c0_98, %c360] : memref<1x16x640xf32, #tpu.memory_space<vmem>>, vector<1x16x128xf32>
    %102 = vector.shape_cast %101 : vector<1x16x128xf32> to vector<16x128xf32>
    %c0_99 = arith.constant 0 : index
    %c0_100 = arith.constant 0 : index
    %c368 = arith.constant 368 : index
    %103 = vector.load %arg2[%c0_99, %c0_100, %c368] : memref<1x16x640xf32, #tpu.memory_space<vmem>>, vector<1x16x128xf32>
    %104 = vector.shape_cast %103 : vector<1x16x128xf32> to vector<16x128xf32>
    %c0_101 = arith.constant 0 : index
    %c0_102 = arith.constant 0 : index
    %c376 = arith.constant 376 : index
    %105 = vector.load %arg2[%c0_101, %c0_102, %c376] : memref<1x16x640xf32, #tpu.memory_space<vmem>>, vector<1x16x128xf32>
    %106 = vector.shape_cast %105 : vector<1x16x128xf32> to vector<16x128xf32>
    %107 = tpu.concatenate %76, %78, %80, %82, %84, %86, %88, %90, %92, %94, %96, %98, %100, %102, %104, %106 in 0 : vector<16x128xf32>, vector<16x128xf32>, vector<16x128xf32>, vector<16x128xf32>, vector<16x128xf32>, vector<16x128xf32>, vector<16x128xf32>, vector<16x128xf32>, vector<16x128xf32>, vector<16x128xf32>, vector<16x128xf32>, vector<16x128xf32>, vector<16x128xf32>, vector<16x128xf32>, vector<16x128xf32>, vector<16x128xf32> -> vector<256x128xf32>
    %c2 = arith.constant 2 : index
    %c0_103 = arith.constant 0 : index
    %c0_104 = arith.constant 0 : index
    %108 = vector.load %arg3[%c2, %c0_103, %c0_104] : memref<4x16x256xf32, #tpu.memory_space<vmem>>, vector<1x16x256xf32>
    %109 = vector.shape_cast %108 : vector<1x16x256xf32> to vector<16x256xf32>
    %cst_105 = arith.constant dense<0.000000e+00> : vector<16x128xf32>
    %110 = tpu.matmul %109, %107, %cst_105 {dimension_numbers = #tpu.dot_dimension_numbers<[1], [0], [0], [1], [0, 0, 1, 1], [], []>} : vector<16x256xf32>, vector<256x128xf32>, vector<16x128xf32> -> vector<16x128xf32>
    %111 = arith.addf %74, %110 : vector<16x128xf32>
    %c0_106 = arith.constant 0 : index
    %c0_107 = arith.constant 0 : index
    %c384 = arith.constant 384 : index
    %112 = vector.load %arg2[%c0_106, %c0_107, %c384] : memref<1x16x640xf32, #tpu.memory_space<vmem>>, vector<1x16x128xf32>
    %113 = vector.shape_cast %112 : vector<1x16x128xf32> to vector<16x128xf32>
    %c0_108 = arith.constant 0 : index
    %c0_109 = arith.constant 0 : index
    %c392 = arith.constant 392 : index
    %114 = vector.load %arg2[%c0_108, %c0_109, %c392] : memref<1x16x640xf32, #tpu.memory_space<vmem>>, vector<1x16x128xf32>
    %115 = vector.shape_cast %114 : vector<1x16x128xf32> to vector<16x128xf32>
    %c0_110 = arith.constant 0 : index
    %c0_111 = arith.constant 0 : index
    %c400 = arith.constant 400 : index
    %116 = vector.load %arg2[%c0_110, %c0_111, %c400] : memref<1x16x640xf32, #tpu.memory_space<vmem>>, vector<1x16x128xf32>
    %117 = vector.shape_cast %116 : vector<1x16x128xf32> to vector<16x128xf32>
    %c0_112 = arith.constant 0 : index
    %c0_113 = arith.constant 0 : index
    %c408 = arith.constant 408 : index
    %118 = vector.load %arg2[%c0_112, %c0_113, %c408] : memref<1x16x640xf32, #tpu.memory_space<vmem>>, vector<1x16x128xf32>
    %119 = vector.shape_cast %118 : vector<1x16x128xf32> to vector<16x128xf32>
    %c0_114 = arith.constant 0 : index
    %c0_115 = arith.constant 0 : index
    %c416 = arith.constant 416 : index
    %120 = vector.load %arg2[%c0_114, %c0_115, %c416] : memref<1x16x640xf32, #tpu.memory_space<vmem>>, vector<1x16x128xf32>
    %121 = vector.shape_cast %120 : vector<1x16x128xf32> to vector<16x128xf32>
    %c0_116 = arith.constant 0 : index
    %c0_117 = arith.constant 0 : index
    %c424 = arith.constant 424 : index
    %122 = vector.load %arg2[%c0_116, %c0_117, %c424] : memref<1x16x640xf32, #tpu.memory_space<vmem>>, vector<1x16x128xf32>
    %123 = vector.shape_cast %122 : vector<1x16x128xf32> to vector<16x128xf32>
    %c0_118 = arith.constant 0 : index
    %c0_119 = arith.constant 0 : index
    %c432 = arith.constant 432 : index
    %124 = vector.load %arg2[%c0_118, %c0_119, %c432] : memref<1x16x640xf32, #tpu.memory_space<vmem>>, vector<1x16x128xf32>
    %125 = vector.shape_cast %124 : vector<1x16x128xf32> to vector<16x128xf32>
    %c0_120 = arith.constant 0 : index
    %c0_121 = arith.constant 0 : index
    %c440 = arith.constant 440 : index
    %126 = vector.load %arg2[%c0_120, %c0_121, %c440] : memref<1x16x640xf32, #tpu.memory_space<vmem>>, vector<1x16x128xf32>
    %127 = vector.shape_cast %126 : vector<1x16x128xf32> to vector<16x128xf32>
    %c0_122 = arith.constant 0 : index
    %c0_123 = arith.constant 0 : index
    %c448 = arith.constant 448 : index
    %128 = vector.load %arg2[%c0_122, %c0_123, %c448] : memref<1x16x640xf32, #tpu.memory_space<vmem>>, vector<1x16x128xf32>
    %129 = vector.shape_cast %128 : vector<1x16x128xf32> to vector<16x128xf32>
    %c0_124 = arith.constant 0 : index
    %c0_125 = arith.constant 0 : index
    %c456 = arith.constant 456 : index
    %130 = vector.load %arg2[%c0_124, %c0_125, %c456] : memref<1x16x640xf32, #tpu.memory_space<vmem>>, vector<1x16x128xf32>
    %131 = vector.shape_cast %130 : vector<1x16x128xf32> to vector<16x128xf32>
    %c0_126 = arith.constant 0 : index
    %c0_127 = arith.constant 0 : index
    %c464 = arith.constant 464 : index
    %132 = vector.load %arg2[%c0_126, %c0_127, %c464] : memref<1x16x640xf32, #tpu.memory_space<vmem>>, vector<1x16x128xf32>
    %133 = vector.shape_cast %132 : vector<1x16x128xf32> to vector<16x128xf32>
    %c0_128 = arith.constant 0 : index
    %c0_129 = arith.constant 0 : index
    %c472 = arith.constant 472 : index
    %134 = vector.load %arg2[%c0_128, %c0_129, %c472] : memref<1x16x640xf32, #tpu.memory_space<vmem>>, vector<1x16x128xf32>
    %135 = vector.shape_cast %134 : vector<1x16x128xf32> to vector<16x128xf32>
    %c0_130 = arith.constant 0 : index
    %c0_131 = arith.constant 0 : index
    %c480 = arith.constant 480 : index
    %136 = vector.load %arg2[%c0_130, %c0_131, %c480] : memref<1x16x640xf32, #tpu.memory_space<vmem>>, vector<1x16x128xf32>
    %137 = vector.shape_cast %136 : vector<1x16x128xf32> to vector<16x128xf32>
    %c0_132 = arith.constant 0 : index
    %c0_133 = arith.constant 0 : index
    %c488 = arith.constant 488 : index
    %138 = vector.load %arg2[%c0_132, %c0_133, %c488] : memref<1x16x640xf32, #tpu.memory_space<vmem>>, vector<1x16x128xf32>
    %139 = vector.shape_cast %138 : vector<1x16x128xf32> to vector<16x128xf32>
    %c0_134 = arith.constant 0 : index
    %c0_135 = arith.constant 0 : index
    %c496 = arith.constant 496 : index
    %140 = vector.load %arg2[%c0_134, %c0_135, %c496] : memref<1x16x640xf32, #tpu.memory_space<vmem>>, vector<1x16x128xf32>
    %141 = vector.shape_cast %140 : vector<1x16x128xf32> to vector<16x128xf32>
    %c0_136 = arith.constant 0 : index
    %c0_137 = arith.constant 0 : index
    %c504 = arith.constant 504 : index
    %142 = vector.load %arg2[%c0_136, %c0_137, %c504] : memref<1x16x640xf32, #tpu.memory_space<vmem>>, vector<1x16x128xf32>
    %143 = vector.shape_cast %142 : vector<1x16x128xf32> to vector<16x128xf32>
    %144 = tpu.concatenate %113, %115, %117, %119, %121, %123, %125, %127, %129, %131, %133, %135, %137, %139, %141, %143 in 0 : vector<16x128xf32>, vector<16x128xf32>, vector<16x128xf32>, vector<16x128xf32>, vector<16x128xf32>, vector<16x128xf32>, vector<16x128xf32>, vector<16x128xf32>, vector<16x128xf32>, vector<16x128xf32>, vector<16x128xf32>, vector<16x128xf32>, vector<16x128xf32>, vector<16x128xf32>, vector<16x128xf32>, vector<16x128xf32> -> vector<256x128xf32>
    %c3 = arith.constant 3 : index
    %c0_138 = arith.constant 0 : index
    %c0_139 = arith.constant 0 : index
    %145 = vector.load %arg3[%c3, %c0_138, %c0_139] : memref<4x16x256xf32, #tpu.memory_space<vmem>>, vector<1x16x256xf32>
    %146 = vector.shape_cast %145 : vector<1x16x256xf32> to vector<16x256xf32>
    %cst_140 = arith.constant dense<0.000000e+00> : vector<16x128xf32>
    %147 = tpu.matmul %146, %144, %cst_140 {dimension_numbers = #tpu.dot_dimension_numbers<[1], [0], [0], [1], [0, 0, 1, 1], [], []>} : vector<16x256xf32>, vector<256x128xf32>, vector<16x128xf32> -> vector<16x128xf32>
    %148 = arith.addf %111, %147 : vector<16x128xf32>
    %c0_141 = arith.constant 0 : index
    %c0_142 = arith.constant 0 : index
    %c0_143 = arith.constant 0 : index
    %149 = vector.load %arg4[%c0_141, %c0_142, %c0_143] : memref<1x16x128xf32, #tpu.memory_space<vmem>>, vector<1x16x128xf32>
    %150 = vector.shape_cast %149 : vector<1x16x128xf32> to vector<16x128xf32>
    %151 = vector.shape_cast %148 : vector<16x128xf32> to vector<1x16x128xf32>
    tpu.vector_store %arg4[%c0_141, %c0_142, %c0_143], %151 {strides = array<i32>} : memref<1x16x128xf32, #tpu.memory_space<vmem>>, vector<1x16x128xf32>,
    return
  }
  func.func @transform_0(%arg0: i32, %arg1: i32) -> (i32, i32, i32) {
    %c0_i32 = arith.constant 0 : i32
    %c0_i32_0 = arith.constant 0 : i32
    %c0_i32_1 = arith.constant 0 : i32
    return %arg0, %c0_i32, %c0_i32_0 : i32, i32, i32
  }
  func.func @transform_1(%arg0: i32, %arg1: i32) -> (i32, i32, i32) {
    %c0_i32 = arith.constant 0 : i32
    %c0_i32_0 = arith.constant 0 : i32
    %c0_i32_1 = arith.constant 0 : i32
    %c0_i32_2 = arith.constant 0 : i32
    return %c0_i32, %c0_i32_0, %c0_i32_1 : i32, i32, i32
  }
  func.func @transform_2(%arg0: i32, %arg1: i32) -> (i32, i32, i32) {
    %c0_i32 = arith.constant 0 : i32
    %c0_i32_0 = arith.constant 0 : i32
    return %arg0, %c0_i32, %arg1 : i32, i32, i32
  }
}

</mosaic_0001>

<llo_original>
// kernel: tpu_custom_call.1
$region0: #{tpu_custom_call.1}
  #allocation0 [shape = 'u32[]', space=smem, size = 0x4, offset = 0x4, fixed_abs, tag = 'smem constant byte address 0x4 - core index']
  #allocation1 [shape = 'u32[72,128]{1,0:T(1,128)}', space=vmem, size = 0x9000, scoped, tag = 'internal scratch']
  %s0 = inlined_call_operand.hbm [shape: f32[2,16,640], index: 0, kind: input, shape index: {}]
  %s1 = inlined_call_operand.hbm [shape: f32[4,16,256], index: 1, kind: input, shape index: {}]
  %s2 = inlined_call_operand.hbm [shape: f32[2,16,128], index: 2, kind: output, shape index: {}]
  %s3 = sld [smem:[#allocation0]]
  $region49: #{tpu_custom_call.1} parent=0
    _
  %s5 = ssub.s32 1, %s3
  %s6 = scalar_select 0, %s5, %s3
  $region1: #{tpu_custom_call.1} parent=0
    #allocation2 [shape = 'u8[81920]{0}', space=vmem, size = 0x14000, scoped, tag = 'input window, operand 0']
    #allocation3 [shape = 's32[2]{0}', space=sflag, size = 0x8, scoped, tag = 'scoped memory for tpu_custom_call.1']
    #allocation4 [shape = 's32[2]{0}', space=sflag, size = 0x8, scoped, tag = 'scoped memory for tpu_custom_call.1']
    #allocation5 [shape = 'u8[65536]{0}', space=vmem, size = 0x10000, scoped, tag = 'input window, operand 1, single buffered']
    #allocation6 [shape = 's32[1]{0}', space=sflag, size = 0x4, scoped, tag = 'scoped memory for tpu_custom_call.1']
    #allocation7 [shape = 'u8[16384]{0}', space=vmem, size = 0x4000, scoped, tag = 'output window, operand 0']
    %7 = vsyncpa [#allocation3], 0
    %s8 = scalar_lea.sflag [#allocation3], 1
    %9 = vsyncpa %s8, 0
    %10 = vsyncpa [#allocation6], 0
    %11 = vsyncpa [#allocation4], 0
    %s12 = scalar_lea.sflag [#allocation4], 1
    %13 = vsyncpa %s12, 0
    loop: start=0, step=1, limit=4
    $region2: #{tpu_custom_call.1} parent=1 // loop_pre_header
      _
    $region3: #{tpu_custom_call.1} parent=1 // loop_header
      %s15 = sphi 0, %s19
      %p16 = scmp.ge.s32.totalorder %s15, 4
      %s22 = sphi 0, %s34
      %s23 = sphi 0, %s30
      %s24 = sphi 0, %s22
      %s25 = sphi 0, %s23
      %s26 = sphi 0, %s24
      %s27 = sphi 0, %s25
      %s37 = sphi 0, %s39
      %s40 = sphi 0, %s37
      %s41 = sphi 0, %s40
      %s57 = sphi 0, %s41
      %s61 = sphi 0, %s61
      %s63 = sphi 0, %s61
      %s64 = sphi 0, %s63
      %s78 = sphi 0, %s64
      %s86 = sphi 0, %s88
      %s89 = sphi 0, %s86
      %s90 = sphi 0, %s89
      %s106 = sphi 0, %s90
    $region4: #{tpu_custom_call.1} parent=1 // loop_header_branch
      %18 = sbr.rel (%p16) target = $region8
    $region5: #{tpu_custom_call.1} parent=1 // loop_body
      %s20 = ssub.s32 %s15, 1
      %s21 = ssub.s32 %s15, 2
      %s28 = sadd.s32 1, %s23
      %p29 = scmp.ge.s32.totalorder %s28, 1
      %s30 = scalar_select %p29, 0, %s28
      %s31 = sadd.s32 1, %s22
      %s32 = scalar_select %p29, %s31, %s22
      %p33 = scmp.ge.s32.totalorder %s32, 2
      %s34 = scalar_select %p33, 0, %s32
      %s35 = ssub.s32 %s22, %s34
      %p36 = scmp.eq.s32.totalorder %s35, 0
      %s38 = sadd.s32 %s37, 1
      %s39 = scalar_select %p36, %s37, %s38
      %p42 = pneg %p36
      %p43 = scmp.eq.s32.totalorder %s15, 1
      %p44 = por %p42, %p43
      %p45 = scmp.ne.s32.totalorder %s37, %s40
      %p46 = scmp.eq.s32.totalorder %s15, 0
      %p47 = por %p45, %p46
      %p48 = scmp.ne.s32.totalorder %s37, %s40
      %p49 = scmp.eq.s32.totalorder %s20, 1
      %p50 = por %p48, %p49
      %p51 = scmp.ne.s32.totalorder %s40, %s41
      %p52 = scmp.eq.s32.totalorder %s20, 0
      %p53 = por %p51, %p52
      %p54 = scmp.ne.s32.totalorder %s40, %s41
      %p55 = scmp.eq.s32.totalorder %s21, 1
      %p56 = por %p54, %p55
      %p58 = scmp.ne.s32.totalorder %s41, %s57
      %p59 = scmp.eq.s32.totalorder %s21, 0
      %p60 = por %p58, %p59
      %s62 = sadd.s32 %s61, 1
      %p65 = scmp.eq.s32.totalorder %s15, 1
      %p66 = scmp.ne.s32.totalorder %s61, %s63
      %p67 = scmp.eq.s32.totalorder %s15, 0
      %p68 = por %p66, %p67
      %p69 = scmp.ne.s32.totalorder %s61, %s63
      %p70 = scmp.eq.s32.totalorder %s20, 1
      %p71 = por %p69, %p70
      %p72 = scmp.ne.s32.totalorder %s63, %s64
      %p73 = scmp.eq.s32.totalorder %s20, 0
      %p74 = por %p72, %p73
      %p75 = scmp.ne.s32.totalorder %s63, %s64
      %p76 = scmp.eq.s32.totalorder %s21, 1
      %p77 = por %p75, %p76
      %p79 = scmp.ne.s32.totalorder %s64, %s78
      %p80 = scmp.eq.s32.totalorder %s21, 0
      %p81 = por %p79, %p80
      %s82 = ssub.s32 %s22, %s34
      %s83 = ssub.s32 %s23, %s30
      %s84 = sor.u32 %s82, %s83
      %p85 = scmp.eq.s32.totalorder %s84, 0
      %s87 = sadd.s32 %s86, 1
      %s88 = scalar_select %p85, %s86, %s87
      %p91 = pneg %p85
      %p92 = scmp.eq.s32.totalorder %s15, 1
      %p93 = por %p91, %p92
      %p94 = scmp.ne.s32.totalorder %s86, %s89
      %p95 = scmp.eq.s32.totalorder %s15, 0
      %p96 = por %p94, %p95
      %p97 = scmp.ne.s32.totalorder %s86, %s89
      %p98 = scmp.eq.s32.totalorder %s20, 1
      %p99 = por %p97, %p98
      %p100 = scmp.ne.s32.totalorder %s89, %s90
      %p101 = scmp.eq.s32.totalorder %s20, 0
      %p102 = por %p100, %p101
      %p103 = scmp.ne.s32.totalorder %s89, %s90
      %p104 = scmp.eq.s32.totalorder %s21, 1
      %p105 = por %p103, %p104
      %p107 = scmp.ne.s32.totalorder %s90, %s106
      %p108 = scmp.eq.s32.totalorder %s21, 0
      %p109 = por %p107, %p108
      %p110 = scmp.le.s32.totalorder 1, %s15
      %p111 = scmp.lt.s32.totalorder %s15, 3
      %p112 = pnand %p110, %p111
      %p113 = pneg %p112
      // Predicated region
      $region9: #{tpu_custom_call.1} parent=5 // pred_check
        _
      $region10: #{tpu_custom_call.1} parent=5 // pred_check_branch
        %115 = sbr.rel (%p112) target = $region12
      $region11: #{tpu_custom_call.1} parent=5 // pred_region
        %s116 = ssub.s32 %s15, 1
        // Predicated region
        $region13: #{tpu_custom_call.1} parent=11 // pred_check
          %p117 = pneg %p74
        $region14: #{tpu_custom_call.1} parent=11 // pred_check_branch
          %119 = sbr.rel (%p117) target = $region16
        $region15: #{tpu_custom_call.1} parent=11 // pred_region
          %121 = vsyncadd [#allocation6], 0
          %s122 = sshll.u32 %s1, 4
          %s123 = int_to_ptr.hbm [resolvable:$true] %s122
          %s124 = sshll.u32 [#allocation5], 4
          %s125 = int_to_ptr.vmem [resolvable:$true] %s124
          %130 = dma.hbm_to_vmem [thread:$0]  %s123, 2048, %s125, [#allocation6], 256, 256, 16
        $region16: #{tpu_custom_call.1} parent=11 // pred_fallthru
          _
      $region12: #{tpu_custom_call.1} parent=5 // pred_fallthru
        _
      %p131 = scmp.lt.s32.totalorder %s15, 2
      // Predicated region
      $region17: #{tpu_custom_call.1} parent=5 // pred_check
        %p132 = pneg %p131
      $region18: #{tpu_custom_call.1} parent=5 // pred_check_branch
        %134 = sbr.rel (%p132) target = $region20
      $region19: #{tpu_custom_call.1} parent=5 // pred_region
        // Predicated region
        $region21: #{tpu_custom_call.1} parent=19 // pred_check
          %p135 = pneg %p47
        $region22: #{tpu_custom_call.1} parent=19 // pred_check_branch
          %137 = sbr.rel (%p135) target = $region24
        $region23: #{tpu_custom_call.1} parent=19 // pred_region
          %s138 = sand.u32 %s37, 1
          %s139 = scalar_lea.sflag [#allocation3], %s138
          %s140 = sand.u32 %s37, 1
          %s141 = smul.addr %s140, 80
          %s142 = scalar_lea.vmem [#allocation2], %s141
          %144 = vsyncadd %s139, 0
          %s145 = smul.addr %s22, 10
          %s146 = smul.addr %s145, 8
          %s147 = scalar_lea.hbm %s0, %s146
          %s148 = sshll.u32 %s147, 4
          %s149 = int_to_ptr.hbm [resolvable:$true] %s148
          %s150 = sshll.u32 %s142, 4
          %s151 = int_to_ptr.vmem [resolvable:$true] %s150
          %156 = dma.hbm_to_vmem [thread:$0]  %s149, 1280, %s151, %s139, 640, 640, 40
        $region24: #{tpu_custom_call.1} parent=19 // pred_fallthru
          _
      $region20: #{tpu_custom_call.1} parent=5 // pred_fallthru
        _
      %p157 = scmp.le.s32.totalorder 1, %s15
      %p158 = scmp.lt.s32.totalorder %s15, 3
      %p159 = pnand %p157, %p158
      %p160 = pneg %p159
      // Predicated region
      $region25: #{tpu_custom_call.1} parent=5 // pred_check
        _
      $region26: #{tpu_custom_call.1} parent=5 // pred_check_branch
        %162 = sbr.rel (%p159) target = $region28
      $region27: #{tpu_custom_call.1} parent=5 // pred_region
        %s163 = ssub.s32 %s15, 1
        %s164 = sand.u32 %s40, 1
        %s165 = scalar_lea.sflag [#allocation3], %s164
        %s166 = sand.u32 %s40, 1
        %s167 = smul.addr %s166, 80
        %s168 = scalar_lea.vmem [#allocation2], %s167
        // Predicated region
        $region29: #{tpu_custom_call.1} parent=27 // pred_check
          %p169 = pneg %p53
        $region30: #{tpu_custom_call.1} parent=27 // pred_check_branch
          %171 = sbr.rel (%p169) target = $region32
        $region31: #{tpu_custom_call.1} parent=27 // pred_region
          %173 = dma.done %s165, 1280
        $region32: #{tpu_custom_call.1} parent=27 // pred_fallthru
          _
        // Predicated region
        $region33: #{tpu_custom_call.1} parent=27 // pred_check
          %p174 = pneg %p74
        $region34: #{tpu_custom_call.1} parent=27 // pred_check_branch
          %176 = sbr.rel (%p174) target = $region36
        $region35: #{tpu_custom_call.1} parent=27 // pred_region
          %178 = dma.done [#allocation6], 2048
        $region36: #{tpu_custom_call.1} parent=27 // pred_fallthru
          _
        %s179 = sand.u32 %s40, 1
        %s180 = scalar_lea.sflag [#allocation3], %s179
        %s181 = sand.u32 %s40, 1
        %s182 = smul.addr %s181, 80
        %s183 = scalar_lea.vmem [#allocation2], %s182
        %p184 = pneg %p53
        %p185 = pneg %p50
        %p186 = pneg %p74
        %p187 = pneg %p71
        %p188 = pneg %p102
        %p189 = pneg %p99
        %s190 = sand.u32 %s89, 1
        %s191 = scalar_lea.sflag [#allocation4], %s190
        %s192 = sand.u32 %s89, 1
        %s193 = smul.addr %s192, 16
        %s194 = scalar_lea.vmem [#allocation7], %s193
        %v195 = vld [vmem:[%s168] sm:$0xff]
        %v196 = vld [vmem:[%s168 + $0x28] sm:$0xff]
        %v197 = vld [vmem:[%s168 + $0x8] sm:$0xff]
        %v198 = vld [vmem:[%s168 + $0x30] sm:$0xff]
        %203 = vrot.lane.b32.xlu0 %v195, 120
        %v204 = vpop.permute.xlu0 %203
        %205 = vrot.lane.b32.xlu0 %v197, 120
        %v206 = vpop.permute.xlu0 %205
        %207 = vrot.lane.b32.xlu0 %v196, 120
        %v208 = vpop.permute.xlu0 %207
        %209 = vrot.lane.b32.xlu0 %v198, 120
        %v210 = vpop.permute.xlu0 %209
        %vm211 = vcmask 982016
        %v212 = vsel %vm211, %v204, %v206
        %v213 = vsel %vm211, %v208, %v210
        %216 = vrot.lane.b32.xlu0 %v195, 112
        %v217 = vpop.permute.xlu0 %216
        %218 = vrot.lane.b32.xlu0 %v197, 112
        %v219 = vpop.permute.xlu0 %218
        %220 = vrot.lane.b32.xlu0 %v196, 112
        %v221 = vpop.permute.xlu0 %220
        %222 = vrot.lane.b32.xlu0 %v198, 112
        %v223 = vpop.permute.xlu0 %222
        %vm224 = vcmask 916480
        %v225 = vsel %vm224, %v217, %v219
        %v226 = vsel %vm224, %v221, %v223
        %229 = vrot.lane.b32.xlu0 %v195, 104
        %v230 = vpop.permute.xlu0 %229
        %231 = vrot.lane.b32.xlu0 %v197, 104
        %v232 = vpop.permute.xlu0 %231
        %233 = vrot.lane.b32.xlu0 %v196, 104
        %v234 = vpop.permute.xlu0 %233
        %235 = vrot.lane.b32.xlu0 %v198, 104
        %v236 = vpop.permute.xlu0 %235
        %vm237 = vcmask 850944
        %v238 = vsel %vm237, %v230, %v232
        %v239 = vsel %vm237, %v234, %v236
        %242 = vrot.lane.b32.xlu0 %v195, 96
        %v243 = vpop.permute.xlu0 %242
        %244 = vrot.lane.b32.xlu0 %v197, 96
        %v245 = vpop.permute.xlu0 %244
        %246 = vrot.lane.b32.xlu0 %v196, 96
        %v247 = vpop.permute.xlu0 %246
        %248 = vrot.lane.b32.xlu0 %v198, 96
        %v249 = vpop.permute.xlu0 %248
        %vm250 = vcmask 785408
        %v251 = vsel %vm250, %v243, %v245
        %v252 = vsel %vm250, %v247, %v249
        %255 = vrot.lane.b32.xlu0 %v195, 88
        %v256 = vpop.permute.xlu0 %255
        %257 = vrot.lane.b32.xlu0 %v197, 88
        %v258 = vpop.permute.xlu0 %257
        %259 = vrot.lane.b32.xlu0 %v196, 88
        %v260 = vpop.permute.xlu0 %259
        %261 = vrot.lane.b32.xlu0 %v198, 88
        %v262 = vpop.permute.xlu0 %261
        %vm263 = vcmask 719872
        %v264 = vsel %vm263, %v256, %v258
        %v265 = vsel %vm263, %v260, %v262
        %268 = vrot.lane.b32.xlu0 %v195, 80
        %v269 = vpop.permute.xlu0 %268
        %270 = vrot.lane.b32.xlu0 %v197, 80
        %v271 = vpop.permute.xlu0 %270
        %272 = vrot.lane.b32.xlu0 %v196, 80
        %v273 = vpop.permute.xlu0 %272
        %274 = vrot.lane.b32.xlu0 %v198, 80
        %v275 = vpop.permute.xlu0 %274
        %vm276 = vcmask 654336
        %v277 = vsel %vm276, %v269, %v271
        %v278 = vsel %vm276, %v273, %v275
        %281 = vrot.lane.b32.xlu0 %v195, 72
        %v282 = vpop.permute.xlu0 %281
        %283 = vrot.lane.b32.xlu0 %v197, 72
        %v284 = vpop.permute.xlu0 %283
        %285 = vrot.lane.b32.xlu0 %v196, 72
        %v286 = vpop.permute.xlu0 %285
        %287 = vrot.lane.b32.xlu0 %v198, 72
        %v288 = vpop.permute.xlu0 %287
        %vm289 = vcmask 588800
        %v290 = vsel %vm289, %v282, %v284
        %v291 = vsel %vm289, %v286, %v288
        %294 = vrot.lane.b32.xlu0 %v195, 64
        %v295 = vpop.permute.xlu0 %294
        %296 = vrot.lane.b32.xlu0 %v197, 64
        %v297 = vpop.permute.xlu0 %296
        %298 = vrot.lane.b32.xlu0 %v196, 64
        %v299 = vpop.permute.xlu0 %298
        %300 = vrot.lane.b32.xlu0 %v198, 64
        %v301 = vpop.permute.xlu0 %300
        %vm302 = vcmask 523264
        %v303 = vsel %vm302, %v295, %v297
        %v304 = vsel %vm302, %v299, %v301
        %307 = vrot.lane.b32.xlu0 %v195, 56
        %v308 = vpop.permute.xlu0 %307
        %309 = vrot.lane.b32.xlu0 %v197, 56
        %v310 = vpop.permute.xlu0 %309
        %311 = vrot.lane.b32.xlu0 %v196, 56
        %v312 = vpop.permute.xlu0 %311
        %313 = vrot.lane.b32.xlu0 %v198, 56
        %v314 = vpop.permute.xlu0 %313
        %vm315 = vcmask 457728
        %v316 = vsel %vm315, %v308, %v310
        %v317 = vsel %vm315, %v312, %v314
        %320 = vrot.lane.b32.xlu0 %v195, 48
        %v321 = vpop.permute.xlu0 %320
        %322 = vrot.lane.b32.xlu0 %v197, 48
        %v323 = vpop.permute.xlu0 %322
        %324 = vrot.lane.b32.xlu0 %v196, 48
        %v325 = vpop.permute.xlu0 %324
        %326 = vrot.lane.b32.xlu0 %v198, 48
        %v327 = vpop.permute.xlu0 %326
        %vm328 = vcmask 392192
        %v329 = vsel %vm328, %v321, %v323
        %v330 = vsel %vm328, %v325, %v327
        %333 = vrot.lane.b32.xlu0 %v195, 40
        %v334 = vpop.permute.xlu0 %333
        %335 = vrot.lane.b32.xlu0 %v197, 40
        %v336 = vpop.permute.xlu0 %335
        %337 = vrot.lane.b32.xlu0 %v196, 40
        %v338 = vpop.permute.xlu0 %337
        %339 = vrot.lane.b32.xlu0 %v198, 40
        %v340 = vpop.permute.xlu0 %339
        %vm341 = vcmask 326656
        %v342 = vsel %vm341, %v334, %v336
        %v343 = vsel %vm341, %v338, %v340
        %346 = vrot.lane.b32.xlu0 %v195, 32
        %v347 = vpop.permute.xlu0 %346
        %348 = vrot.lane.b32.xlu0 %v197, 32
        %v349 = vpop.permute.xlu0 %348
        %350 = vrot.lane.b32.xlu0 %v196, 32
        %v351 = vpop.permute.xlu0 %350
        %352 = vrot.lane.b32.xlu0 %v198, 32
        %v353 = vpop.permute.xlu0 %352
        %vm354 = vcmask 261120
        %v355 = vsel %vm354, %v347, %v349
        %v356 = vsel %vm354, %v351, %v353
        %359 = vrot.lane.b32.xlu0 %v195, 24
        %v360 = vpop.permute.xlu0 %359
        %361 = vrot.lane.b32.xlu0 %v197, 24
        %v362 = vpop.permute.xlu0 %361
        %363 = vrot.lane.b32.xlu0 %v196, 24
        %v364 = vpop.permute.xlu0 %363
        %365 = vrot.lane.b32.xlu0 %v198, 24
        %v366 = vpop.permute.xlu0 %365
        %vm367 = vcmask 195584
        %v368 = vsel %vm367, %v360, %v362
        %v369 = vsel %vm367, %v364, %v366
        %372 = vrot.lane.b32.xlu0 %v195, 16
        %v373 = vpop.permute.xlu0 %372
        %374 = vrot.lane.b32.xlu0 %v197, 16
        %v375 = vpop.permute.xlu0 %374
        %376 = vrot.lane.b32.xlu0 %v196, 16
        %v377 = vpop.permute.xlu0 %376
        %378 = vrot.lane.b32.xlu0 %v198, 16
        %v379 = vpop.permute.xlu0 %378
        %vm380 = vcmask 130048
        %v381 = vsel %vm380, %v373, %v375
        %v382 = vsel %vm380, %v377, %v379
        %385 = vrot.lane.b32.xlu0 %v195, 8
        %v386 = vpop.permute.xlu0 %385
        %387 = vrot.lane.b32.xlu0 %v197, 8
        %v388 = vpop.permute.xlu0 %387
        %389 = vrot.lane.b32.xlu0 %v196, 8
        %v390 = vpop.permute.xlu0 %389
        %391 = vrot.lane.b32.xlu0 %v198, 8
        %v392 = vpop.permute.xlu0 %391
        %vm393 = vcmask 64512
        %v394 = vsel %vm393, %v386, %v388
        %v395 = vsel %vm393, %v390, %v392
        %v398 = vld [vmem:[#allocation5] sm:$0xff]
        %v399 = vld [vmem:[#allocation5 + $0x8] sm:$0xff]
        %v400 = vld [vmem:[#allocation5 + $0x10] sm:$0xff]
        %v401 = vld [vmem:[#allocation5 + $0x18] sm:$0xff]
        %v402 = vld [vmem:[%s168 + $0x10] sm:$0xff]
        %v403 = vld [vmem:[%s168 + $0x38] sm:$0xff]
        %406 = vrot.lane.b32.xlu0 %v402, 120
        %v407 = vpop.permute.xlu0 %406
        %408 = vrot.lane.b32.xlu0 %v403, 120
        %v409 = vpop.permute.xlu0 %408
        %v410 = vsel %vm211, %v206, %v407
        %v411 = vsel %vm211, %v210, %v409
        %414 = vrot.lane.b32.xlu0 %v402, 112
        %v415 = vpop.permute.xlu0 %414
        %416 = vrot.lane.b32.xlu0 %v403, 112
        %v417 = vpop.permute.xlu0 %416
        %v418 = vsel %vm224, %v219, %v415
        %v419 = vsel %vm224, %v223, %v417
        %422 = vrot.lane.b32.xlu0 %v402, 104
        %v423 = vpop.permute.xlu0 %422
        %424 = vrot.lane.b32.xlu0 %v403, 104
        %v425 = vpop.permute.xlu0 %424
        %v426 = vsel %vm237, %v232, %v423
        %v427 = vsel %vm237, %v236, %v425
        %430 = vrot.lane.b32.xlu0 %v402, 96
        %v431 = vpop.permute.xlu0 %430
        %432 = vrot.lane.b32.xlu0 %v403, 96
        %v433 = vpop.permute.xlu0 %432
        %v434 = vsel %vm250, %v245, %v431
        %v435 = vsel %vm250, %v249, %v433
        %438 = vrot.lane.b32.xlu0 %v402, 88
        %v439 = vpop.permute.xlu0 %438
        %440 = vrot.lane.b32.xlu0 %v403, 88
        %v441 = vpop.permute.xlu0 %440
        %v442 = vsel %vm263, %v258, %v439
        %v443 = vsel %vm263, %v262, %v441
        %446 = vrot.lane.b32.xlu0 %v402, 80
        %v447 = vpop.permute.xlu0 %446
        %448 = vrot.lane.b32.xlu0 %v403, 80
        %v449 = vpop.permute.xlu0 %448
        %v450 = vsel %vm276, %v271, %v447
        %v451 = vsel %vm276, %v275, %v449
        %454 = vrot.lane.b32.xlu0 %v402, 72
        %v455 = vpop.permute.xlu0 %454
        %456 = vrot.lane.b32.xlu0 %v403, 72
        %v457 = vpop.permute.xlu0 %456
        %v458 = vsel %vm289, %v284, %v455
        %v459 = vsel %vm289, %v288, %v457
        %462 = vrot.lane.b32.xlu0 %v402, 64
        %v463 = vpop.permute.xlu0 %462
        %464 = vrot.lane.b32.xlu0 %v403, 64
        %v465 = vpop.permute.xlu0 %464
        %v466 = vsel %vm302, %v297, %v463
        %v467 = vsel %vm302, %v301, %v465
        %470 = vrot.lane.b32.xlu0 %v402, 56
        %v471 = vpop.permute.xlu0 %470
        %472 = vrot.lane.b32.xlu0 %v403, 56
        %v473 = vpop.permute.xlu0 %472
        %v474 = vsel %vm315, %v310, %v471
        %v475 = vsel %vm315, %v314, %v473
        %478 = vrot.lane.b32.xlu0 %v402, 48
        %v479 = vpop.permute.xlu0 %478
        %480 = vrot.lane.b32.xlu0 %v403, 48
        %v481 = vpop.permute.xlu0 %480
        %v482 = vsel %vm328, %v323, %v479
        %v483 = vsel %vm328, %v327, %v481
        %486 = vrot.lane.b32.xlu0 %v402, 40
        %v487 = vpop.permute.xlu0 %486
        %488 = vrot.lane.b32.xlu0 %v403, 40
        %v489 = vpop.permute.xlu0 %488
        %v490 = vsel %vm341, %v336, %v487
        %v491 = vsel %vm341, %v340, %v489
        %494 = vrot.lane.b32.xlu0 %v402, 32
        %v495 = vpop.permute.xlu0 %494
        %496 = vrot.lane.b32.xlu0 %v403, 32
        %v497 = vpop.permute.xlu0 %496
        %v498 = vsel %vm354, %v349, %v495
        %v499 = vsel %vm354, %v353, %v497
        %502 = vrot.lane.b32.xlu0 %v402, 24
        %v503 = vpop.permute.xlu0 %502
        %504 = vrot.lane.b32.xlu0 %v403, 24
        %v505 = vpop.permute.xlu0 %504
        %v506 = vsel %vm367, %v362, %v503
        %v507 = vsel %vm367, %v366, %v505
        %510 = vrot.lane.b32.xlu0 %v402, 16
        %v511 = vpop.permute.xlu0 %510
        %512 = vrot.lane.b32.xlu0 %v403, 16
        %v513 = vpop.permute.xlu0 %512
        %v514 = vsel %vm380, %v375, %v511
        %v515 = vsel %vm380, %v379, %v513
        %518 = vrot.lane.b32.xlu0 %v402, 8
        %v519 = vpop.permute.xlu0 %518
        %520 = vrot.lane.b32.xlu0 %v403, 8
        %v521 = vpop.permute.xlu0 %520
        %v522 = vsel %vm393, %v388, %v519
        %v523 = vsel %vm393, %v392, %v521
        %s526 = scalar_lea.vmem [#allocation5], 32
        %v527 = vld [vmem:[%s526] sm:$0xff]
        %v528 = vld [vmem:[%s526 + $0x8] sm:$0xff]
        %v529 = vld [vmem:[%s526 + $0x10] sm:$0xff]
        %v530 = vld [vmem:[%s526 + $0x18] sm:$0xff]
        %531 = vmatpush.msra.mxu0 %v459
        %532 = vmatpush.msra.mxu0 %v458
        %533 = vmatpush.msra.mxu0 %v451
        %534 = vmatpush.msra.mxu0 %v450
        %535 = vmatpush.msra.mxu0 %v443
        %536 = vmatpush.msra.mxu0 %v442
        %537 = vmatpush.msra.mxu0 %v435
        %538 = vmatpush.msra.mxu0 %v434
        %539 = vmatpush.msra.mxu0 %v427
        %540 = vmatpush.msra.mxu0 %v426
        %541 = vmatpush.msra.mxu0 %v419
        %542 = vmatpush.msra.mxu0 %v418
        %543 = vmatpush.msra.mxu0 %v411
        %544 = vmatpush.msra.mxu0 %v410
        %545 = vmatpush.msra.mxu0 %v198
        %546 = vmatpush.msra.mxu0 %v197
        %547 = vmatmul.f32.gmra.mxu0 %v527
        %v548 = vpop.f32.mrf.mxu0
        %v549 = vadd.f32 0.0, %v548
        %550 = vmatmul.f32.gmra.mxu0 %v529
        %v551 = vpop.f32.mrf.mxu0
        %v552 = vadd.f32 0.0, %v551
        %553 = vdwg.mxu0
        %554 = vmatpush.msra.mxu0 %v523
        %555 = vmatpush.msra.mxu0 %v522
        %556 = vmatpush.msra.mxu0 %v515
        %557 = vmatpush.msra.mxu0 %v514
        %558 = vmatpush.msra.mxu0 %v507
        %559 = vmatpush.msra.mxu0 %v506
        %560 = vmatpush.msra.mxu0 %v499
        %561 = vmatpush.msra.mxu0 %v498
        %562 = vmatpush.msra.mxu0 %v491
        %563 = vmatpush.msra.mxu0 %v490
        %564 = vmatpush.msra.mxu0 %v483
        %565 = vmatpush.msra.mxu0 %v482
        %566 = vmatpush.msra.mxu0 %v475
        %567 = vmatpush.msra.mxu0 %v474
        %568 = vmatpush.msra.mxu0 %v467
        %569 = vmatpush.msra.mxu0 %v466
        %570 = vmatmul.f32.gmra.mxu0 %v528
        %v571 = vpop.f32.mrf.mxu0
        %v572 = vadd.f32 %v549, %v571
        %573 = vmatmul.f32.gmra.mxu0 %v530
        %v574 = vpop.f32.mrf.mxu0
        %v575 = vadd.f32 %v552, %v574
        %576 = vdwg.mxu0
        %577 = vmatpush.msra.mxu0 %v291
        %578 = vmatpush.msra.mxu0 %v290
        %579 = vmatpush.msra.mxu0 %v278
        %580 = vmatpush.msra.mxu0 %v277
        %581 = vmatpush.msra.mxu0 %v265
        %582 = vmatpush.msra.mxu0 %v264
        %583 = vmatpush.msra.mxu0 %v252
        %584 = vmatpush.msra.mxu0 %v251
        %585 = vmatpush.msra.mxu0 %v239
        %586 = vmatpush.msra.mxu0 %v238
        %587 = vmatpush.msra.mxu0 %v226
        %588 = vmatpush.msra.mxu0 %v225
        %589 = vmatpush.msra.mxu0 %v213
        %590 = vmatpush.msra.mxu0 %v212
        %591 = vmatpush.msra.mxu0 %v196
        %592 = vmatpush.msra.mxu0 %v195
        %593 = vmatmul.f32.gmra.mxu0 %v398
        %v594 = vpop.f32.mrf.mxu0
        %v595 = vadd.f32 %v572, %v594
        %596 = vmatmul.f32.gmra.mxu0 %v400
        %v597 = vpop.f32.mrf.mxu0
        %v598 = vadd.f32 %v575, %v597
        %599 = vdwg.mxu0
        %600 = vmatpush.msra.mxu0 %v395
        %601 = vmatpush.msra.mxu0 %v394
        %602 = vmatpush.msra.mxu0 %v382
        %603 = vmatpush.msra.mxu0 %v381
        %604 = vmatpush.msra.mxu0 %v369
        %605 = vmatpush.msra.mxu0 %v368
        %606 = vmatpush.msra.mxu0 %v356
        %607 = vmatpush.msra.mxu0 %v355
        %608 = vmatpush.msra.mxu0 %v343
        %609 = vmatpush.msra.mxu0 %v342
        %610 = vmatpush.msra.mxu0 %v330
        %611 = vmatpush.msra.mxu0 %v329
        %612 = vmatpush.msra.mxu0 %v317
        %613 = vmatpush.msra.mxu0 %v316
        %614 = vmatpush.msra.mxu0 %v304
        %615 = vmatpush.msra.mxu0 %v303
        %616 = vmatmul.f32.gmra.mxu0 %v399
        %v617 = vpop.f32.mrf.mxu0
        %v618 = vadd.f32 %v595, %v617
        %619 = vmatmul.f32.gmra.mxu0 %v401
        %v620 = vpop.f32.mrf.mxu0
        %v621 = vadd.f32 %v598, %v620
        %622 = vdwg.mxu0
        %v623 = vld [vmem:[%s168 + $0x10] sm:$0xff]
        %v624 = vld [vmem:[%s168 + $0x18] sm:$0xff]
        %v625 = vld [vmem:[%s168 + $0x38] sm:$0xff]
        %v626 = vld [vmem:[%s168 + $0x40] sm:$0xff]
        %631 = vrot.lane.b32.xlu0 %v623, 120
        %v632 = vpop.permute.xlu0 %631
        %633 = vrot.lane.b32.xlu0 %v624, 120
        %v634 = vpop.permute.xlu0 %633
        %635 = vrot.lane.b32.xlu0 %v625, 120
        %v636 = vpop.permute.xlu0 %635
        %637 = vrot.lane.b32.xlu0 %v626, 120
        %v638 = vpop.permute.xlu0 %637
        %v639 = vsel %vm211, %v632, %v634
        %v640 = vsel %vm211, %v636, %v638
        %643 = vrot.lane.b32.xlu0 %v623, 112
        %v644 = vpop.permute.xlu0 %643
        %645 = vrot.lane.b32.xlu0 %v624, 112
        %v646 = vpop.permute.xlu0 %645
        %647 = vrot.lane.b32.xlu0 %v625, 112
        %v648 = vpop.permute.xlu0 %647
        %649 = vrot.lane.b32.xlu0 %v626, 112
        %v650 = vpop.permute.xlu0 %649
        %v651 = vsel %vm224, %v644, %v646
        %v652 = vsel %vm224, %v648, %v650
        %655 = vrot.lane.b32.xlu0 %v623, 104
        %v656 = vpop.permute.xlu0 %655
        %657 = vrot.lane.b32.xlu0 %v624, 104
        %v658 = vpop.permute.xlu0 %657
        %659 = vrot.lane.b32.xlu0 %v625, 104
        %v660 = vpop.permute.xlu0 %659
        %661 = vrot.lane.b32.xlu0 %v626, 104
        %v662 = vpop.permute.xlu0 %661
        %v663 = vsel %vm237, %v656, %v658
        %v664 = vsel %vm237, %v660, %v662
        %667 = vrot.lane.b32.xlu0 %v623, 96
        %v668 = vpop.permute.xlu0 %667
        %669 = vrot.lane.b32.xlu0 %v624, 96
        %v670 = vpop.permute.xlu0 %669
        %671 = vrot.lane.b32.xlu0 %v625, 96
        %v672 = vpop.permute.xlu0 %671
        %673 = vrot.lane.b32.xlu0 %v626, 96
        %v674 = vpop.permute.xlu0 %673
        %v675 = vsel %vm250, %v668, %v670
        %v676 = vsel %vm250, %v672, %v674
        %679 = vrot.lane.b32.xlu0 %v623, 88
        %v680 = vpop.permute.xlu0 %679
        %681 = vrot.lane.b32.xlu0 %v624, 88
        %v682 = vpop.permute.xlu0 %681
        %683 = vrot.lane.b32.xlu0 %v625, 88
        %v684 = vpop.permute.xlu0 %683
        %685 = vrot.lane.b32.xlu0 %v626, 88
        %v686 = vpop.permute.xlu0 %685
        %v687 = vsel %vm263, %v680, %v682
        %v688 = vsel %vm263, %v684, %v686
        %691 = vrot.lane.b32.xlu0 %v623, 80
        %v692 = vpop.permute.xlu0 %691
        %693 = vrot.lane.b32.xlu0 %v624, 80
        %v694 = vpop.permute.xlu0 %693
        %695 = vrot.lane.b32.xlu0 %v625, 80
        %v696 = vpop.permute.xlu0 %695
        %697 = vrot.lane.b32.xlu0 %v626, 80
        %v698 = vpop.permute.xlu0 %697
        %v699 = vsel %vm276, %v692, %v694
        %v700 = vsel %vm276, %v696, %v698
        %703 = vrot.lane.b32.xlu0 %v623, 72
        %v704 = vpop.permute.xlu0 %703
        %705 = vrot.lane.b32.xlu0 %v624, 72
        %v706 = vpop.permute.xlu0 %705
        %707 = vrot.lane.b32.xlu0 %v625, 72
        %v708 = vpop.permute.xlu0 %707
        %709 = vrot.lane.b32.xlu0 %v626, 72
        %v710 = vpop.permute.xlu0 %709
        %v711 = vsel %vm289, %v704, %v706
        %v712 = vsel %vm289, %v708, %v710
        %715 = vrot.lane.b32.xlu0 %v623, 64
        %v716 = vpop.permute.xlu0 %715
        %717 = vrot.lane.b32.xlu0 %v624, 64
        %v718 = vpop.permute.xlu0 %717
        %719 = vrot.lane.b32.xlu0 %v625, 64
        %v720 = vpop.permute.xlu0 %719
        %721 = vrot.lane.b32.xlu0 %v626, 64
        %v722 = vpop.permute.xlu0 %721
        %v723 = vsel %vm302, %v716, %v718
        %v724 = vsel %vm302, %v720, %v722
        %727 = vrot.lane.b32.xlu0 %v623, 56
        %v728 = vpop.permute.xlu0 %727
        %729 = vrot.lane.b32.xlu0 %v624, 56
        %v730 = vpop.permute.xlu0 %729
        %731 = vrot.lane.b32.xlu0 %v625, 56
        %v732 = vpop.permute.xlu0 %731
        %733 = vrot.lane.b32.xlu0 %v626, 56
        %v734 = vpop.permute.xlu0 %733
        %v735 = vsel %vm315, %v728, %v730
        %v736 = vsel %vm315, %v732, %v734
        %739 = vrot.lane.b32.xlu0 %v623, 48
        %v740 = vpop.permute.xlu0 %739
        %741 = vrot.lane.b32.xlu0 %v624, 48
        %v742 = vpop.permute.xlu0 %741
        %743 = vrot.lane.b32.xlu0 %v625, 48
        %v744 = vpop.permute.xlu0 %743
        %745 = vrot.lane.b32.xlu0 %v626, 48
        %v746 = vpop.permute.xlu0 %745
        %v747 = vsel %vm328, %v740, %v742
        %v748 = vsel %vm328, %v744, %v746
        %751 = vrot.lane.b32.xlu0 %v623, 40
        %v752 = vpop.permute.xlu0 %751
        %753 = vrot.lane.b32.xlu0 %v624, 40
        %v754 = vpop.permute.xlu0 %753
        %755 = vrot.lane.b32.xlu0 %v625, 40
        %v756 = vpop.permute.xlu0 %755
        %757 = vrot.lane.b32.xlu0 %v626, 40
        %v758 = vpop.permute.xlu0 %757
        %v759 = vsel %vm341, %v752, %v754
        %v760 = vsel %vm341, %v756, %v758
        %763 = vrot.lane.b32.xlu0 %v623, 32
        %v764 = vpop.permute.xlu0 %763
        %765 = vrot.lane.b32.xlu0 %v624, 32
        %v766 = vpop.permute.xlu0 %765
        %767 = vrot.lane.b32.xlu0 %v625, 32
        %v768 = vpop.permute.xlu0 %767
        %769 = vrot.lane.b32.xlu0 %v626, 32
        %v770 = vpop.permute.xlu0 %769
        %v771 = vsel %vm354, %v764, %v766
        %v772 = vsel %vm354, %v768, %v770
        %775 = vrot.lane.b32.xlu0 %v623, 24
        %v776 = vpop.permute.xlu0 %775
        %777 = vrot.lane.b32.xlu0 %v624, 24
        %v778 = vpop.permute.xlu0 %777
        %779 = vrot.lane.b32.xlu0 %v625, 24
        %v780 = vpop.permute.xlu0 %779
        %781 = vrot.lane.b32.xlu0 %v626, 24
        %v782 = vpop.permute.xlu0 %781
        %v783 = vsel %vm367, %v776, %v778
        %v784 = vsel %vm367, %v780, %v782
        %787 = vrot.lane.b32.xlu0 %v623, 16
        %v788 = vpop.permute.xlu0 %787
        %789 = vrot.lane.b32.xlu0 %v624, 16
        %v790 = vpop.permute.xlu0 %789
        %791 = vrot.lane.b32.xlu0 %v625, 16
        %v792 = vpop.permute.xlu0 %791
        %793 = vrot.lane.b32.xlu0 %v626, 16
        %v794 = vpop.permute.xlu0 %793
        %v795 = vsel %vm380, %v788, %v790
        %v796 = vsel %vm380, %v792, %v794
        %799 = vrot.lane.b32.xlu0 %v623, 8
        %v800 = vpop.permute.xlu0 %799
        %801 = vrot.lane.b32.xlu0 %v624, 8
        %v802 = vpop.permute.xlu0 %801
        %803 = vrot.lane.b32.xlu0 %v625, 8
        %v804 = vpop.permute.xlu0 %803
        %805 = vrot.lane.b32.xlu0 %v626, 8
        %v806 = vpop.permute.xlu0 %805
        %v807 = vsel %vm393, %v800, %v802
        %v808 = vsel %vm393, %v804, %v806
        %s811 = scalar_lea.vmem [#allocation5], 64
        %v812 = vld [vmem:[%s811] sm:$0xff]
        %v813 = vld [vmem:[%s811 + $0x8] sm:$0xff]
        %v814 = vld [vmem:[%s811 + $0x10] sm:$0xff]
        %v815 = vld [vmem:[%s811 + $0x18] sm:$0xff]
        %816 = vmatpush.msra.mxu0 %v712
        %817 = vmatpush.msra.mxu0 %v711
        %818 = vmatpush.msra.mxu0 %v700
        %819 = vmatpush.msra.mxu0 %v699
        %820 = vmatpush.msra.mxu0 %v688
        %821 = vmatpush.msra.mxu0 %v687
        %822 = vmatpush.msra.mxu0 %v676
        %823 = vmatpush.msra.mxu0 %v675
        %824 = vmatpush.msra.mxu0 %v664
        %825 = vmatpush.msra.mxu0 %v663
        %826 = vmatpush.msra.mxu0 %v652
        %827 = vmatpush.msra.mxu0 %v651
        %828 = vmatpush.msra.mxu0 %v640
        %829 = vmatpush.msra.mxu0 %v639
        %830 = vmatpush.msra.mxu0 %v403
        %831 = vmatpush.msra.mxu0 %v402
        %832 = vmatmul.f32.gmra.mxu0 %v812
        %v833 = vpop.f32.mrf.mxu0
        %v834 = vadd.f32 0.0, %v833
        %835 = vmatmul.f32.gmra.mxu0 %v814
        %v836 = vpop.f32.mrf.mxu0
        %v837 = vadd.f32 0.0, %v836
        %838 = vdwg.mxu0
        %839 = vmatpush.msra.mxu0 %v808
        %840 = vmatpush.msra.mxu0 %v807
        %841 = vmatpush.msra.mxu0 %v796
        %842 = vmatpush.msra.mxu0 %v795
        %843 = vmatpush.msra.mxu0 %v784
        %844 = vmatpush.msra.mxu0 %v783
        %845 = vmatpush.msra.mxu0 %v772
        %846 = vmatpush.msra.mxu0 %v771
        %847 = vmatpush.msra.mxu0 %v760
        %848 = vmatpush.msra.mxu0 %v759
        %849 = vmatpush.msra.mxu0 %v748
        %850 = vmatpush.msra.mxu0 %v747
        %851 = vmatpush.msra.mxu0 %v736
        %852 = vmatpush.msra.mxu0 %v735
        %853 = vmatpush.msra.mxu0 %v724
        %854 = vmatpush.msra.mxu0 %v723
        %855 = vmatmul.f32.gmra.mxu0 %v813
        %v856 = vpop.f32.mrf.mxu0
        %v857 = vadd.f32 %v834, %v856
        %858 = vmatmul.f32.gmra.mxu0 %v815
        %v859 = vpop.f32.mrf.mxu0
        %v860 = vadd.f32 %v837, %v859
        %861 = vdwg.mxu0
        %v862 = vadd.f32 %v618, %v857
        %v863 = vadd.f32 %v621, %v860
        %v864 = vld [vmem:[%s168 + $0x18] sm:$0xff]
        %v865 = vld [vmem:[%s168 + $0x20] sm:$0xff]
        %v866 = vld [vmem:[%s168 + $0x40] sm:$0xff]
        %v867 = vld [vmem:[%s168 + $0x48] sm:$0xff]
        %872 = vrot.lane.b32.xlu0 %v864, 120
        %v873 = vpop.permute.xlu0 %872
        %874 = vrot.lane.b32.xlu0 %v865, 120
        %v875 = vpop.permute.xlu0 %874
        %876 = vrot.lane.b32.xlu0 %v866, 120
        %v877 = vpop.permute.xlu0 %876
        %878 = vrot.lane.b32.xlu0 %v867, 120
        %v879 = vpop.permute.xlu0 %878
        %v880 = vsel %vm211, %v873, %v875
        %v881 = vsel %vm211, %v877, %v879
        %884 = vrot.lane.b32.xlu0 %v864, 112
        %v885 = vpop.permute.xlu0 %884
        %886 = vrot.lane.b32.xlu0 %v865, 112
        %v887 = vpop.permute.xlu0 %886
        %888 = vrot.lane.b32.xlu0 %v866, 112
        %v889 = vpop.permute.xlu0 %888
        %890 = vrot.lane.b32.xlu0 %v867, 112
        %v891 = vpop.permute.xlu0 %890
        %v892 = vsel %vm224, %v885, %v887
        %v893 = vsel %vm224, %v889, %v891
        %896 = vrot.lane.b32.xlu0 %v864, 104
        %v897 = vpop.permute.xlu0 %896
        %898 = vrot.lane.b32.xlu0 %v865, 104
        %v899 = vpop.permute.xlu0 %898
        %900 = vrot.lane.b32.xlu0 %v866, 104
        %v901 = vpop.permute.xlu0 %900
        %902 = vrot.lane.b32.xlu0 %v867, 104
        %v903 = vpop.permute.xlu0 %902
        %v904 = vsel %vm237, %v897, %v899
        %v905 = vsel %vm237, %v901, %v903
        %908 = vrot.lane.b32.xlu0 %v864, 96
        %v909 = vpop.permute.xlu0 %908
        %910 = vrot.lane.b32.xlu0 %v865, 96
        %v911 = vpop.permute.xlu0 %910
        %912 = vrot.lane.b32.xlu0 %v866, 96
        %v913 = vpop.permute.xlu0 %912
        %914 = vrot.lane.b32.xlu0 %v867, 96
        %v915 = vpop.permute.xlu0 %914
        %v916 = vsel %vm250, %v909, %v911
        %v917 = vsel %vm250, %v913, %v915
        %920 = vrot.lane.b32.xlu0 %v864, 88
        %v921 = vpop.permute.xlu0 %920
        %922 = vrot.lane.b32.xlu0 %v865, 88
        %v923 = vpop.permute.xlu0 %922
        %924 = vrot.lane.b32.xlu0 %v866, 88
        %v925 = vpop.permute.xlu0 %924
        %926 = vrot.lane.b32.xlu0 %v867, 88
        %v927 = vpop.permute.xlu0 %926
        %v928 = vsel %vm263, %v921, %v923
        %v929 = vsel %vm263, %v925, %v927
        %932 = vrot.lane.b32.xlu0 %v864, 80
        %v933 = vpop.permute.xlu0 %932
        %934 = vrot.lane.b32.xlu0 %v865, 80
        %v935 = vpop.permute.xlu0 %934
        %936 = vrot.lane.b32.xlu0 %v866, 80
        %v937 = vpop.permute.xlu0 %936
        %938 = vrot.lane.b32.xlu0 %v867, 80
        %v939 = vpop.permute.xlu0 %938
        %v940 = vsel %vm276, %v933, %v935
        %v941 = vsel %vm276, %v937, %v939
        %944 = vrot.lane.b32.xlu0 %v864, 72
        %v945 = vpop.permute.xlu0 %944
        %946 = vrot.lane.b32.xlu0 %v865, 72
        %v947 = vpop.permute.xlu0 %946
        %948 = vrot.lane.b32.xlu0 %v866, 72
        %v949 = vpop.permute.xlu0 %948
        %950 = vrot.lane.b32.xlu0 %v867, 72
        %v951 = vpop.permute.xlu0 %950
        %v952 = vsel %vm289, %v945, %v947
        %v953 = vsel %vm289, %v949, %v951
        %956 = vrot.lane.b32.xlu0 %v864, 64
        %v957 = vpop.permute.xlu0 %956
        %958 = vrot.lane.b32.xlu0 %v865, 64
        %v959 = vpop.permute.xlu0 %958
        %960 = vrot.lane.b32.xlu0 %v866, 64
        %v961 = vpop.permute.xlu0 %960
        %962 = vrot.lane.b32.xlu0 %v867, 64
        %v963 = vpop.permute.xlu0 %962
        %v964 = vsel %vm302, %v957, %v959
        %v965 = vsel %vm302, %v961, %v963
        %968 = vrot.lane.b32.xlu0 %v864, 56
        %v969 = vpop.permute.xlu0 %968
        %970 = vrot.lane.b32.xlu0 %v865, 56
        %v971 = vpop.permute.xlu0 %970
        %972 = vrot.lane.b32.xlu0 %v866, 56
        %v973 = vpop.permute.xlu0 %972
        %974 = vrot.lane.b32.xlu0 %v867, 56
        %v975 = vpop.permute.xlu0 %974
        %v976 = vsel %vm315, %v969, %v971
        %v977 = vsel %vm315, %v973, %v975
        %980 = vrot.lane.b32.xlu0 %v864, 48
        %v981 = vpop.permute.xlu0 %980
        %982 = vrot.lane.b32.xlu0 %v865, 48
        %v983 = vpop.permute.xlu0 %982
        %984 = vrot.lane.b32.xlu0 %v866, 48
        %v985 = vpop.permute.xlu0 %984
        %986 = vrot.lane.b32.xlu0 %v867, 48
        %v987 = vpop.permute.xlu0 %986
        %v988 = vsel %vm328, %v981, %v983
        %v989 = vsel %vm328, %v985, %v987
        %992 = vrot.lane.b32.xlu0 %v864, 40
        %v993 = vpop.permute.xlu0 %992
        %994 = vrot.lane.b32.xlu0 %v865, 40
        %v995 = vpop.permute.xlu0 %994
        %996 = vrot.lane.b32.xlu0 %v866, 40
        %v997 = vpop.permute.xlu0 %996
        %998 = vrot.lane.b32.xlu0 %v867, 40
        %v999 = vpop.permute.xlu0 %998
        %v1000 = vsel %vm341, %v993, %v995
        %v1001 = vsel %vm341, %v997, %v999
        %1004 = vrot.lane.b32.xlu0 %v864, 32
        %v1005 = vpop.permute.xlu0 %1004
        %1006 = vrot.lane.b32.xlu0 %v865, 32
        %v1007 = vpop.permute.xlu0 %1006
        %1008 = vrot.lane.b32.xlu0 %v866, 32
        %v1009 = vpop.permute.xlu0 %1008
        %1010 = vrot.lane.b32.xlu0 %v867, 32
        %v1011 = vpop.permute.xlu0 %1010
        %v1012 = vsel %vm354, %v1005, %v1007
        %v1013 = vsel %vm354, %v1009, %v1011
        %1016 = vrot.lane.b32.xlu0 %v864, 24
        %v1017 = vpop.permute.xlu0 %1016
        %1018 = vrot.lane.b32.xlu0 %v865, 24
        %v1019 = vpop.permute.xlu0 %1018
        %1020 = vrot.lane.b32.xlu0 %v866, 24
        %v1021 = vpop.permute.xlu0 %1020
        %1022 = vrot.lane.b32.xlu0 %v867, 24
        %v1023 = vpop.permute.xlu0 %1022
        %v1024 = vsel %vm367, %v1017, %v1019
        %v1025 = vsel %vm367, %v1021, %v1023
        %1028 = vrot.lane.b32.xlu0 %v864, 16
        %v1029 = vpop.permute.xlu0 %1028
        %1030 = vrot.lane.b32.xlu0 %v865, 16
        %v1031 = vpop.permute.xlu0 %1030
        %1032 = vrot.lane.b32.xlu0 %v866, 16
        %v1033 = vpop.permute.xlu0 %1032
        %1034 = vrot.lane.b32.xlu0 %v867, 16
        %v1035 = vpop.permute.xlu0 %1034
        %v1036 = vsel %vm380, %v1029, %v1031
        %v1037 = vsel %vm380, %v1033, %v1035
        %1040 = vrot.lane.b32.xlu0 %v864, 8
        %v1041 = vpop.permute.xlu0 %1040
        %1042 = vrot.lane.b32.xlu0 %v865, 8
        %v1043 = vpop.permute.xlu0 %1042
        %1044 = vrot.lane.b32.xlu0 %v866, 8
        %v1045 = vpop.permute.xlu0 %1044
        %1046 = vrot.lane.b32.xlu0 %v867, 8
        %v1047 = vpop.permute.xlu0 %1046
        %v1048 = vsel %vm393, %v1041, %v1043
        %v1049 = vsel %vm393, %v1045, %v1047
        %s1052 = scalar_lea.vmem [#allocation5], 96
        %v1053 = vld [vmem:[%s1052] sm:$0xff]
        %v1054 = vld [vmem:[%s1052 + $0x8] sm:$0xff]
        %v1055 = vld [vmem:[%s1052 + $0x10] sm:$0xff]
        %v1056 = vld [vmem:[%s1052 + $0x18] sm:$0xff]
        %1057 = vmatpush.msra.mxu0 %v953
        %1058 = vmatpush.msra.mxu0 %v952
        %1059 = vmatpush.msra.mxu0 %v941
        %1060 = vmatpush.msra.mxu0 %v940
        %1061 = vmatpush.msra.mxu0 %v929
        %1062 = vmatpush.msra.mxu0 %v928
        %1063 = vmatpush.msra.mxu0 %v917
        %1064 = vmatpush.msra.mxu0 %v916
        %1065 = vmatpush.msra.mxu0 %v905
        %1066 = vmatpush.msra.mxu0 %v904
        %1067 = vmatpush.msra.mxu0 %v893
        %1068 = vmatpush.msra.mxu0 %v892
        %1069 = vmatpush.msra.mxu0 %v881
        %1070 = vmatpush.msra.mxu0 %v880
        %1071 = vmatpush.msra.mxu0 %v626
        %1072 = vmatpush.msra.mxu0 %v624
        %1073 = vmatmul.f32.gmra.mxu0 %v1053
        %v1074 = vpop.f32.mrf.mxu0
        %v1075 = vadd.f32 0.0, %v1074
        %1076 = vmatmul.f32.gmra.mxu0 %v1055
        %v1077 = vpop.f32.mrf.mxu0
        %v1078 = vadd.f32 0.0, %v1077
        %1079 = vdwg.mxu0
        %1080 = vmatpush.msra.mxu0 %v1049
        %1081 = vmatpush.msra.mxu0 %v1048
        %1082 = vmatpush.msra.mxu0 %v1037
        %1083 = vmatpush.msra.mxu0 %v1036
        %1084 = vmatpush.msra.mxu0 %v1025
        %1085 = vmatpush.msra.mxu0 %v1024
        %1086 = vmatpush.msra.mxu0 %v1013
        %1087 = vmatpush.msra.mxu0 %v1012
        %1088 = vmatpush.msra.mxu0 %v1001
        %1089 = vmatpush.msra.mxu0 %v1000
        %1090 = vmatpush.msra.mxu0 %v989
        %1091 = vmatpush.msra.mxu0 %v988
        %1092 = vmatpush.msra.mxu0 %v977
        %1093 = vmatpush.msra.mxu0 %v976
        %1094 = vmatpush.msra.mxu0 %v965
        %1095 = vmatpush.msra.mxu0 %v964
        %1096 = vmatmul.f32.gmra.mxu0 %v1054
        %v1097 = vpop.f32.mrf.mxu0
        %v1098 = vadd.f32 %v1075, %v1097
        %1099 = vmatmul.f32.gmra.mxu0 %v1056
        %v1100 = vpop.f32.mrf.mxu0
        %v1101 = vadd.f32 %v1078, %v1100
        %1102 = vdwg.mxu0
        %v1103 = vadd.f32 %v862, %v1098
        %v1104 = vadd.f32 %v863, %v1101
        %1105 = vst [vmem:[%s194] sm:$0xff] %v1103
        %1106 = vst [vmem:[%s194 + $0x8] sm:$0xff] %v1104
        %s1107 = sand.u32 %s89, 1
        %s1108 = scalar_lea.sflag [#allocation4], %s1107
        %s1109 = sand.u32 %s89, 1
        %s1110 = smul.addr %s1109, 16
        %s1111 = scalar_lea.vmem [#allocation7], %s1110
        // Predicated region
        $region37: #{tpu_custom_call.1} parent=27 // pred_check
          %p1112 = pneg %p99
        $region38: #{tpu_custom_call.1} parent=27 // pred_check_branch
          %1114 = sbr.rel (%p1112) target = $region40
        $region39: #{tpu_custom_call.1} parent=27 // pred_region
          %1116 = vsyncadd %s1108, 0
          %s1117 = smul.addr %s24, 2
          %s1118 = sadd.s32 %s25, %s1117
          %s1119 = smul.addr %s1118, 8
          %s1120 = scalar_lea.hbm %s2, %s1119
          %s1121 = sshll.u32 %s1111, 4
          %s1122 = int_to_ptr.vmem [resolvable:$true] %s1121
          %s1123 = sshll.u32 %s1120, 4
          %s1124 = int_to_ptr.hbm [resolvable:$true] %s1123
          %1129 = dma.vmem_to_hbm [thread:$0]  %s1122, 256, %s1124, %s1108, 128, 128, 8
        $region40: #{tpu_custom_call.1} parent=27 // pred_fallthru
          _
      $region28: #{tpu_custom_call.1} parent=5 // pred_fallthru
        _
      %p1130 = scmp.le.s32.totalorder 2, %s15
      // Predicated region
      $region41: #{tpu_custom_call.1} parent=5 // pred_check
        %p1131 = pneg %p1130
      $region42: #{tpu_custom_call.1} parent=5 // pred_check_branch
        %1133 = sbr.rel (%p1131) target = $region44
      $region43: #{tpu_custom_call.1} parent=5 // pred_region
        %s1134 = ssub.s32 %s15, 2
        // Predicated region
        $region45: #{tpu_custom_call.1} parent=43 // pred_check
          %p1135 = pneg %p105
        $region46: #{tpu_custom_call.1} parent=43 // pred_check_branch
          %1137 = sbr.rel (%p1135) target = $region48
        $region47: #{tpu_custom_call.1} parent=43 // pred_region
          %s1138 = sand.u32 %s90, 1
          %s1139 = scalar_lea.sflag [#allocation4], %s1138
          %s1140 = sand.u32 %s90, 1
          %s1141 = smul.addr %s1140, 16
          %s1142 = scalar_lea.vmem [#allocation7], %s1141
          %1144 = dma.done %s1139, 256
        $region48: #{tpu_custom_call.1} parent=43 // pred_fallthru
          _
      $region44: #{tpu_custom_call.1} parent=5 // pred_fallthru
        _
    $region6: #{tpu_custom_call.1} parent=1 // loop_footer
      %s19 = sadd.s32 1, %s15
    $region7: #{tpu_custom_call.1} parent=1 // loop_footer_branch
      %14 = sbr.rel target = $region3
    $region8: #{tpu_custom_call.1} parent=1 // loop_exit
      _
    %1145 = vsyncpa [#allocation3], 1
    %s1146 = scalar_lea.sflag [#allocation3], 1
    %1147 = vsyncpa %s1146, 1
    %1148 = vsyncpa [#allocation6], 1
    %1149 = vsyncpa [#allocation4], 1
    %s1150 = scalar_lea.sflag [#allocation4], 1
    %1151 = vsyncpa %s1150, 1

</llo_original>
